<compile_context>
chip_gen: v7x
topology: tpu7x:2x2x1
jax: 0.10.0
libtpu: 0.0.40
codegen_flags: <defaults>
</compile_context>

<pallas_src>
import numpy as np
import jax
import jax.numpy as jnp
from jax.experimental import pallas as pl
from jax.experimental.pallas import tpu as pltpu


# ----------------------------------------------------------------------------
# Interpolation index/weight rule (PyTorch align_corners=False, integer scale).
# ----------------------------------------------------------------------------
def _axis_indices(in_size, s):
    out_size = in_size * s
    o = np.arange(out_size, dtype=np.float64)
    src = np.maximum((o + 0.5) / s - 0.5, 0.0)          # PyTorch clamps src < 0 to 0
    i0 = np.minimum(np.floor(src).astype(np.int64), in_size - 1)
    frac = (src - i0).astype(np.float32)
    i1 = np.minimum(i0 + 1, in_size - 1)                 # edge clamp of the 2nd tap
    return i0.astype(np.int32), i1.astype(np.int32), frac


def _interp_matrix(in_size, s):
    """Dense (out_size, in_size) 1-D linear-interpolation matrix (2 taps per row)."""
    out_size = in_size * s
    i0, i1, f = _axis_indices(in_size, s)
    A = np.zeros((out_size, in_size), np.float32)
    rows = np.arange(out_size)
    np.add.at(A, (rows, i0), 1.0 - f)
    np.add.at(A, (rows, i1), f)
    return A


# ----------------------------------------------------------------------------
# Generation-aware tiling heuristics.
# ----------------------------------------------------------------------------
def _hw_info():
    """(vmem_capacity_bytes, tensorcores_per_chip); conservative fallbacks."""
    vmem_cap = 64 * 1024 * 1024          # v7x-sized fallback, safe on every generation
    n_tc = 1
    try:
        vmem_cap = int(pltpu.get_tpu_info().vmem_capacity_bytes)
    except Exception:
        pass
    try:
        kind = jax.devices()[0].device_kind.lower()
        if "v7" in kind or "7x" in kind:      # v7x: 2 TensorCores per chip
            n_tc = 2
    except Exception:
        pass
    return vmem_cap, n_tc


def _divisors(n):
    return [d for d in range(1, n + 1) if n % d == 0]


def _pick_ohw_tile(OHW, HW, budget_bytes):
    """Output-lane (OH*OW) column block: multiple of 128 dividing OHW (unmasked,
    lane-dense stores), sized so the bf16 kron(A_h,A_w)^T column block fits."""
    if OHW % 128 != 0:
        return OHW                            # tiny spatial sizes: single full block
    cands = [c for c in range(128, OHW + 1, 128) if OHW % c == 0]
    fit = [c for c in cands if HW * c * 2 * 2 <= budget_bytes]   # bf16, <=2 buffers
    return max(fit) if fit else cands[0]


def _pick_bc_tile(BC, D, OD, HW, ohw_tile, n_col, budget_bytes, min_total_steps):
    """Batch*channel tile: largest divisor of BC whose per-step working set fits the
    VMEM budget, with the block-diagonal D-interp's bt^2 MAC growth kept well below
    the H/W-interp matmul and (on dual-TC chips) enough grid steps to pipeline.
    Prime/awkward BC degrades gracefully to bt=1 (correct, just less MXU-efficient)."""
    def fits(bt):
        x_blk = 2 * bt * D * HW * 4                 # f32 input block, double-buffered
        o_blk = 2 * bt * OD * ohw_tile * 4          # f32 output block, double-buffered
        adb = bt * OD * bt * D * 2                  # bf16 kron(I_bt, A_d), single-buffered
        interm = bt * OD * HW * 4                   # f32 intermediate of the 1st matmul
        return x_blk + o_blk + adb + interm <= budget_bytes

    def layout_ok(bt):                              # (8,128) rule on the sublane dim
        return (bt * D) % 8 == 0 or bt == BC

    cands = [bt for bt in _divisors(BC) if fits(bt) and layout_ok(bt)]
    if not cands:
        cands = [bt for bt in _divisors(BC) if layout_ok(bt)] or [1]
    capped = [bt for bt in cands if bt * D <= ohw_tile] or cands
    # v7x: >= 2 pipelined steps per TensorCore; v5e/v6e: fewest, largest steps.
    stepped = [bt for bt in capped if (BC // bt) * n_col >= min_total_steps]
    return max(stepped or capped)


def _maybe_single_buffered(block_shape, index_map, single):
    """BlockSpec; grid-constant operands get pipeline_mode=pl.Buffered(1) — their
    index_map never changes, so double-buffering only doubles their VMEM share."""
    if single and hasattr(pl, "Buffered"):
        try:
            return pl.BlockSpec(block_shape, index_map, pipeline_mode=pl.Buffered(1))
        except TypeError:                 # BlockSpec without pipeline_mode support
            pass
    return pl.BlockSpec(block_shape, index_map)


# ----------------------------------------------------------------------------
# Pallas kernel: two lane-dense 2-D MXU matmuls per (bc-tile, column-tile) step.
# ----------------------------------------------------------------------------
def _trilinear_kernel(x_ref, adb_ref, ahw_ref, o_ref):
    # x_ref:   (bt*D,  HW)        f32   input rows for this bc tile
    # adb_ref: (bt*OD, bt*D)      bf16  kron(I_bt, A_d)        (grid-constant)
    # ahw_ref: (HW, ohw_tile)     bf16  kron(A_h, A_w)^T column block
    # o_ref:   (bt*OD, ohw_tile)  f32
    xb = x_ref[...].astype(jnp.bfloat16)       # same rounding MXU default would apply
    # Depth interpolation first (on the un-upsampled H*W -> cheapest place for it).
    t = jnp.dot(adb_ref[...], xb, preferred_element_type=jnp.float32)
    # Joint H/W interpolation; bf16 operands, f32 accumulation (default precision).
    out = jnp.dot(t.astype(jnp.bfloat16), ahw_ref[...],
                  preferred_element_type=jnp.float32)
    o_ref[...] = out.astype(o_ref.dtype)


def upsample_trilinear(x, up_scale=2):
    """nn.Upsample(scale_factor=up_scale, mode='trilinear') forward (align_corners=False).

    x : (N, C, D, H, W) float32  ->  (N, C, D*s, H*s, W*s) float32
    """
    N, C, D, H, W = x.shape
    s = int(up_scale)
    OD, OH, OW = D * s, H * s, W * s
    BC, HW, OHW = N * C, H * W, OH * OW

    # Small interpolation matrices, built at trace time (shape-only), pre-cast to
    # bf16 (exact for s=2 weights; halves their HBM/VMEM traffic, removes the
    # per-step f32->bf16 cast the compiler would otherwise insert before the MXU).
    A_d = _interp_matrix(D, s)                                    # (OD, D)
    A_hw = np.kron(_interp_matrix(H, s), _interp_matrix(W, s))    # (OH*OW, H*W)
    A_hwT = jnp.asarray(A_hw.T, dtype=jnp.bfloat16)               # (HW, OHW)

    # Generation-aware tiling.
    vmem_cap, n_tc = _hw_info()
    usable = int(vmem_cap * 0.7)
    ohw_tile = _pick_ohw_tile(OHW, HW, usable // 3)
    n_col = OHW // ohw_tile
    ahw_block_bytes = HW * ohw_tile * 2 * (1 if n_col == 1 else 2)
    min_total_steps = 4 if n_tc >= 2 else 1
    bc_tile = _pick_bc_tile(BC, D, OD, HW, ohw_tile, n_col,
                            max(usable - ahw_block_bytes, 1 << 20), min_total_steps)
    n_bc = BC // bc_tile

    A_dB = jnp.asarray(np.kron(np.eye(bc_tile, dtype=np.float32), A_d),
                       dtype=jnp.bfloat16)                        # (bt*OD, bt*D)

    # Leading/trailing-dim merge only -> free (no transpose, no padding, no patches).
    x2 = x.reshape(BC * D, HW)

    # Advisory cost estimate so XLA can overlap this call with neighbouring ops.
    flops = 2 * (n_col * BC * OD * (bc_tile * D) * HW + BC * OD * HW * OHW)
    bytes_accessed = (BC * D * HW * 4 + BC * OD * OHW * 4
                      + HW * OHW * 2 + bc_tile * OD * bc_tile * D * 2)

    out = pl.pallas_call(
        _trilinear_kernel,
        out_shape=jax.ShapeDtypeStruct((BC * OD, OHW), jnp.float32),
        grid=(n_bc, n_col),
        in_specs=[
            pl.BlockSpec((bc_tile * D, HW), lambda i, j: (i, 0)),
            _maybe_single_buffered((bc_tile * OD, bc_tile * D),
                                   lambda i, j: (0, 0), single=True),
            _maybe_single_buffered((HW, ohw_tile),
                                   lambda i, j: (0, j), single=(n_col == 1)),
        ],
        out_specs=pl.BlockSpec((bc_tile * OD, ohw_tile), lambda i, j: (i, j)),
        compiler_params=pltpu.CompilerParams(
            dimension_semantics=("parallel", "parallel"),
            vmem_limit_bytes=int(vmem_cap * 0.85)),
        cost_estimate=pl.CostEstimate(flops=flops, transcendentals=0,
                                      bytes_accessed=bytes_accessed),
    )(x2, A_dB, A_hwT)

    # Splitting leading/trailing contiguous dims only -> free.
    return out.reshape(N, C, OD, OH, OW)


# ----------------------------------------------------------------------------
# Pure-JAX reference: gather-based trilinear, f32 throughout.
# ----------------------------------------------------------------------------
def _reference_trilinear(x, up_scale):
    y = x
    for axis in (2, 3, 4):
        size = x.shape[axis]
        i0, i1, f = _axis_indices(size, up_scale)
        a = jnp.take(y, jnp.asarray(i0), axis=axis)
        b = jnp.take(y, jnp.asarray(i1), axis=axis)
        shape = [1] * 5
        shape[axis] = -1
        fb = jnp.asarray(f).reshape(shape)
        y = a * (1.0 - fb) + b * fb
    return y


if __name__ == "__main__":
    key = jax.random.PRNGKey(0)
    N, C, D, H, W = 2, 4, 16, 16, 16        # small NCDHW input (mode='3d')
    up_scale = 2

    x = jax.random.normal(key, (N, C, D, H, W), dtype=jnp.float32)

    fwd = jax.jit(lambda v: upsample_trilinear(v, up_scale=up_scale))
    y = jax.block_until_ready(fwd(x))
    assert y.shape == (N, C, D * up_scale, H * up_scale, W * up_scale), y.shape

    y_ref = jax.block_until_ready(_reference_trilinear(x, up_scale))
    # bf16 MXU operands (f32 accumulation); the s=2 interpolation weights are exact
    # in bf16, so the only error source is rounding of the data / intermediate.
    assert bool(jnp.allclose(y, y_ref, rtol=3e-2, atol=3e-2)), (
        "mismatch vs reference, max abs diff = "
        + str(float(jnp.max(jnp.abs(y - y_ref)))))

    print("KERNEL_OK")
</pallas_src>

<mosaic_0001>
module attributes {stable_mosaic.version = 11 : i64} {
  func.func @_trilinear_kernel(%arg0: i32, %arg1: i32, %arg2: memref<128x256xf32, #tpu.memory_space<vmem>>, %arg3: memref<256x128xbf16, #tpu.memory_space<vmem>>, %arg4: memref<256x1024xbf16, #tpu.memory_space<vmem>>, %arg5: memref<256x1024xf32, #tpu.memory_space<vmem>>) attributes {dimension_semantics = [#tpu.dimension_semantics<parallel>, #tpu.dimension_semantics<parallel>], iteration_bounds = array<i64: 1, 1>, scalar_prefetch = 0 : i64, scratch_operands = 0 : i64, tpu.core_type = #tpu.core_type<tc>, window_params = [{transform_indices = @transform_0, window_bounds = array<i64: 128, 256>}, {pipeline_mode = #tpu.pipeline_mode<synchronous>, transform_indices = @transform_1, window_bounds = array<i64: 256, 128>}, {pipeline_mode = #tpu.pipeline_mode<synchronous>, transform_indices = @transform_2, window_bounds = array<i64: 256, 1024>}, {transform_indices = @transform_3, window_bounds = array<i64: 256, 1024>}]} {
    %c0 = arith.constant 0 : index
    %c0_0 = arith.constant 0 : index
    %0 = vector.load %arg2[%c0, %c0_0] : memref<128x256xf32, #tpu.memory_space<vmem>>, vector<128x256xf32>
    %1 = arith.truncf %0 : vector<128x256xf32> to vector<128x256xbf16>
    %c0_1 = arith.constant 0 : index
    %c0_2 = arith.constant 0 : index
    %2 = vector.load %arg3[%c0_1, %c0_2] : memref<256x128xbf16, #tpu.memory_space<vmem>>, vector<256x128xbf16>
    %cst = arith.constant dense<0.000000e+00> : vector<256x256xf32>
    %3 = tpu.matmul %2, %1, %cst {dimension_numbers = #tpu.dot_dimension_numbers<[1], [0], [0], [1], [0, 0, 1, 1], [], []>} : vector<256x128xbf16>, vector<128x256xbf16>, vector<256x256xf32> -> vector<256x256xf32>
    %4 = arith.truncf %3 : vector<256x256xf32> to vector<256x256xbf16>
    %c0_3 = arith.constant 0 : index
    %c0_4 = arith.constant 0 : index
    %5 = vector.load %arg4[%c0_3, %c0_4] : memref<256x1024xbf16, #tpu.memory_space<vmem>>, vector<256x1024xbf16>
    %cst_5 = arith.constant dense<0.000000e+00> : vector<256x1024xf32>
    %6 = tpu.matmul %4, %5, %cst_5 {dimension_numbers = #tpu.dot_dimension_numbers<[1], [0], [0], [1], [0, 0, 1, 1], [], []>} : vector<256x256xbf16>, vector<256x1024xbf16>, vector<256x1024xf32> -> vector<256x1024xf32>
    %c0_6 = arith.constant 0 : index
    %c0_7 = arith.constant 0 : index
    %7 = vector.load %arg5[%c0_6, %c0_7] : memref<256x1024xf32, #tpu.memory_space<vmem>>, vector<256x1024xf32>
    tpu.vector_store %arg5[%c0_6, %c0_7], %6 {strides = array<i32>} : memref<256x1024xf32, #tpu.memory_space<vmem>>, vector<256x1024xf32>,
    return
  }
  func.func @transform_0(%arg0: i32, %arg1: i32) -> (i32, i32) {
    %c0_i32 = arith.constant 0 : i32
    %c0_i32_0 = arith.constant 0 : i32
    return %arg0, %c0_i32 : i32, i32
  }
  func.func @transform_1(%arg0: i32, %arg1: i32) -> (i32, i32) {
    %c0_i32 = arith.constant 0 : i32
    %c0_i32_0 = arith.constant 0 : i32
    %c0_i32_1 = arith.constant 0 : i32
    return %c0_i32, %c0_i32_0 : i32, i32
  }
  func.func @transform_2(%arg0: i32, %arg1: i32) -> (i32, i32) {
    %c0_i32 = arith.constant 0 : i32
    %c0_i32_0 = arith.constant 0 : i32
    return %c0_i32, %arg1 : i32, i32
  }
  func.func @transform_3(%arg0: i32, %arg1: i32) -> (i32, i32) {
    %c0_i32 = arith.constant 0 : i32
    return %arg0, %arg1 : i32, i32
  }
}

</mosaic_0001>

<llo_original>
// kernel: _lambda_.1
$region0: #{_lambda_.1}
  #allocation0 [shape = 'u32[]', space=smem, size = 0x4, offset = 0x4, fixed_abs, tag = 'smem constant byte address 0x4 - core index']
  #allocation1 [shape = 'u32[144,128]{1,0:T(1,128)}', space=vmem, size = 0x12000, scoped, tag = 'internal scratch']
  %s0 = inlined_call_operand.vmem [shape: f32[128,256], index: 0, kind: input, shape index: {}]
  %s1 = inlined_call_operand.hbm [shape: bf16[256,128], index: 1, kind: input, shape index: {}]
  %s2 = inlined_call_operand.vmem [shape: bf16[256,1024], index: 2, kind: input, shape index: {}]
  %s3 = inlined_call_operand.vmem [shape: f32[256,1024], index: 3, kind: output, shape index: {}]
  %s4 = sld [smem:[#allocation0]]
  $region26: #{_lambda_.1} parent=0
    _
  %s6 = ssub.s32 1, %s4
  %s7 = scalar_select 0, %s6, %s4
  $region1: #{_lambda_.1} parent=0
    #allocation2 [shape = 'u8[65536]{0}', space=vmem, size = 0x10000, scoped, tag = 'input window, operand 1, single buffered']
    #allocation3 [shape = 's32[1]{0}', space=sflag, size = 0x4, scoped, tag = 'scoped memory for _lambda_.1']
    %8 = vsyncpa [#allocation3], 0
    // Predicated region
    $region2: #{_lambda_.1} parent=1 // pred_check
      _
    $region3: #{_lambda_.1} parent=1 // pred_check_branch
      %10 = sbr.rel (0) target = $region5
    $region4: #{_lambda_.1} parent=1 // pred_region
      _
    $region5: #{_lambda_.1} parent=1 // pred_fallthru
      _
    // Predicated region
    $region6: #{_lambda_.1} parent=1 // pred_check
      _
    $region7: #{_lambda_.1} parent=1 // pred_check_branch
      %12 = sbr.rel (0) target = $region9
    $region8: #{_lambda_.1} parent=1 // pred_region
      %s14 = ssub.s32 2048, 2048
      %15 = vsyncadd [#allocation3], %s14
      %s16 = sshll.u32 [#allocation2], 4
      %s17 = int_to_ptr.vmem [resolvable:$true] %s16
      %22 = dma.hbm_to_vmem [thread:$0]  %s1, 2048, %s17, [#allocation3], 64, 64, 4
    $region9: #{_lambda_.1} parent=1 // pred_fallthru
      _
    // Predicated region
    $region10: #{_lambda_.1} parent=1 // pred_check
      _
    $region11: #{_lambda_.1} parent=1 // pred_check_branch
      %24 = sbr.rel (0) target = $region13
    $region12: #{_lambda_.1} parent=1 // pred_region
      _
    $region13: #{_lambda_.1} parent=1 // pred_fallthru
      _
    // Predicated region
    $region14: #{_lambda_.1} parent=1 // pred_check
      _
    $region15: #{_lambda_.1} parent=1 // pred_check_branch
      %26 = sbr.rel (0) target = $region17
    $region16: #{_lambda_.1} parent=1 // pred_region
      %27 = dma.done [#allocation3], 2048
    $region17: #{_lambda_.1} parent=1 // pred_fallthru
      _
    %v29 = vld [vmem:[%s0] sm:$0xff]
    %v30 = vld [vmem:[%s0 + $0x8] sm:$0xff]
    %v31 = vld [vmem:[%s0 + $0x10] sm:$0xff]
    %v32 = vld [vmem:[%s0 + $0x18] sm:$0xff]
    %v33 = vld [vmem:[%s0 + $0x20] sm:$0xff]
    %v34 = vld [vmem:[%s0 + $0x28] sm:$0xff]
    %v35 = vld [vmem:[%s0 + $0x30] sm:$0xff]
    %v36 = vld [vmem:[%s0 + $0x38] sm:$0xff]
    %v37 = vld [vmem:[%s0 + $0x40] sm:$0xff]
    %v38 = vld [vmem:[%s0 + $0x48] sm:$0xff]
    %v39 = vld [vmem:[%s0 + $0x50] sm:$0xff]
    %v40 = vld [vmem:[%s0 + $0x58] sm:$0xff]
    %v41 = vld [vmem:[%s0 + $0x60] sm:$0xff]
    %v42 = vld [vmem:[%s0 + $0x68] sm:$0xff]
    %v43 = vld [vmem:[%s0 + $0x70] sm:$0xff]
    %v44 = vld [vmem:[%s0 + $0x78] sm:$0xff]
    %v45 = vld [vmem:[%s0 + $0x80] sm:$0xff]
    %v46 = vld [vmem:[%s0 + $0x88] sm:$0xff]
    %v47 = vld [vmem:[%s0 + $0x90] sm:$0xff]
    %v48 = vld [vmem:[%s0 + $0x98] sm:$0xff]
    %v49 = vld [vmem:[%s0 + $0xa0] sm:$0xff]
    %v50 = vld [vmem:[%s0 + $0xa8] sm:$0xff]
    %v51 = vld [vmem:[%s0 + $0xb0] sm:$0xff]
    %v52 = vld [vmem:[%s0 + $0xb8] sm:$0xff]
    %v53 = vld [vmem:[%s0 + $0xc0] sm:$0xff]
    %v54 = vld [vmem:[%s0 + $0xc8] sm:$0xff]
    %v55 = vld [vmem:[%s0 + $0xd0] sm:$0xff]
    %v56 = vld [vmem:[%s0 + $0xd8] sm:$0xff]
    %v57 = vld [vmem:[%s0 + $0xe0] sm:$0xff]
    %v58 = vld [vmem:[%s0 + $0xe8] sm:$0xff]
    %v59 = vld [vmem:[%s0 + $0xf0] sm:$0xff]
    %v60 = vld [vmem:[%s0 + $0xf8] sm:$0xff]
    %v61 = vpack.c.bf16 %v31, %v29
    %v62 = vpack.c.bf16 %v32, %v30
    %v63 = vpack.c.bf16 %v35, %v33
    %v64 = vpack.c.bf16 %v36, %v34
    %v65 = vpack.c.bf16 %v39, %v37
    %v66 = vpack.c.bf16 %v40, %v38
    %v67 = vpack.c.bf16 %v43, %v41
    %v68 = vpack.c.bf16 %v44, %v42
    %v69 = vpack.c.bf16 %v47, %v45
    %v70 = vpack.c.bf16 %v48, %v46
    %v71 = vpack.c.bf16 %v51, %v49
    %v72 = vpack.c.bf16 %v52, %v50
    %v73 = vpack.c.bf16 %v55, %v53
    %v74 = vpack.c.bf16 %v56, %v54
    %v75 = vpack.c.bf16 %v59, %v57
    %v76 = vpack.c.bf16 %v60, %v58
    %v77 = vld [vmem:[#allocation2] sm:$0xf]
    %v78 = vld [vmem:[#allocation2 + $0x4] sm:$0xf]
    %v79 = vld [vmem:[#allocation2 + $0x8] sm:$0xf]
    %v80 = vld [vmem:[#allocation2 + $0xc] sm:$0xf]
    %v81 = vld [vmem:[#allocation2 + $0x10] sm:$0xf]
    %v82 = vld [vmem:[#allocation2 + $0x14] sm:$0xf]
    %v83 = vld [vmem:[#allocation2 + $0x18] sm:$0xf]
    %v84 = vld [vmem:[#allocation2 + $0x1c] sm:$0xf]
    %v85 = vld [vmem:[#allocation2 + $0x20] sm:$0xf]
    %v86 = vld [vmem:[#allocation2 + $0x24] sm:$0xf]
    %v87 = vld [vmem:[#allocation2 + $0x28] sm:$0xf]
    %v88 = vld [vmem:[#allocation2 + $0x2c] sm:$0xf]
    %v89 = vld [vmem:[#allocation2 + $0x30] sm:$0xf]
    %v90 = vld [vmem:[#allocation2 + $0x34] sm:$0xf]
    %v91 = vld [vmem:[#allocation2 + $0x38] sm:$0xf]
    %v92 = vld [vmem:[#allocation2 + $0x3c] sm:$0xf]
    %v93 = vld [vmem:[#allocation2 + $0x40] sm:$0xf]
    %v94 = vld [vmem:[#allocation2 + $0x44] sm:$0xf]
    %v95 = vld [vmem:[#allocation2 + $0x48] sm:$0xf]
    %v96 = vld [vmem:[#allocation2 + $0x4c] sm:$0xf]
    %v97 = vld [vmem:[#allocation2 + $0x50] sm:$0xf]
    %v98 = vld [vmem:[#allocation2 + $0x54] sm:$0xf]
    %v99 = vld [vmem:[#allocation2 + $0x58] sm:$0xf]
    %v100 = vld [vmem:[#allocation2 + $0x5c] sm:$0xf]
    %v101 = vld [vmem:[#allocation2 + $0x60] sm:$0xf]
    %v102 = vld [vmem:[#allocation2 + $0x64] sm:$0xf]
    %v103 = vld [vmem:[#allocation2 + $0x68] sm:$0xf]
    %v104 = vld [vmem:[#allocation2 + $0x6c] sm:$0xf]
    %v105 = vld [vmem:[#allocation2 + $0x70] sm:$0xf]
    %v106 = vld [vmem:[#allocation2 + $0x74] sm:$0xf]
    %v107 = vld [vmem:[#allocation2 + $0x78] sm:$0xf]
    %v108 = vld [vmem:[#allocation2 + $0x7c] sm:$0xf]
    %v141 = vunpack.c.l.b16 %v77
    %v142 = vunpack.c.l.b16 %v78
    %v143 = vunpack.c.l.b16 %v79
    %v144 = vunpack.c.l.b16 %v80
    %v145 = vunpack.c.l.b16 %v81
    %v146 = vunpack.c.l.b16 %v82
    %v147 = vunpack.c.l.b16 %v83
    %v148 = vunpack.c.l.b16 %v84
    %v149 = vunpack.c.l.b16 %v85
    %v150 = vunpack.c.l.b16 %v86
    %v151 = vunpack.c.l.b16 %v87
    %v152 = vunpack.c.l.b16 %v88
    %v153 = vunpack.c.l.b16 %v89
    %v154 = vunpack.c.l.b16 %v90
    %v155 = vunpack.c.l.b16 %v91
    %v156 = vunpack.c.l.b16 %v92
    %v157 = vunpack.c.l.b16 %v93
    %v158 = vunpack.c.l.b16 %v94
    %v159 = vunpack.c.l.b16 %v95
    %v160 = vunpack.c.l.b16 %v96
    %v161 = vunpack.c.l.b16 %v97
    %v162 = vunpack.c.l.b16 %v98
    %v163 = vunpack.c.l.b16 %v99
    %v164 = vunpack.c.l.b16 %v100
    %v165 = vunpack.c.l.b16 %v101
    %v166 = vunpack.c.l.b16 %v102
    %v167 = vunpack.c.l.b16 %v103
    %v168 = vunpack.c.l.b16 %v104
    %v169 = vunpack.c.l.b16 %v105
    %v170 = vunpack.c.l.b16 %v106
    %v171 = vunpack.c.l.b16 %v107
    %v172 = vunpack.c.l.b16 %v108
    %v173 = vpack.c.b16 %v142, %v141
    %v174 = vpack.c.b16 %v144, %v143
    %v175 = vpack.c.b16 %v146, %v145
    %v176 = vpack.c.b16 %v148, %v147
    %v177 = vpack.c.b16 %v150, %v149
    %v178 = vpack.c.b16 %v152, %v151
    %v179 = vpack.c.b16 %v154, %v153
    %v180 = vpack.c.b16 %v156, %v155
    %v181 = vpack.c.b16 %v158, %v157
    %v182 = vpack.c.b16 %v160, %v159
    %v183 = vpack.c.b16 %v162, %v161
    %v184 = vpack.c.b16 %v164, %v163
    %v185 = vpack.c.b16 %v166, %v165
    %v186 = vpack.c.b16 %v168, %v167
    %v187 = vpack.c.b16 %v170, %v169
    %v188 = vpack.c.b16 %v172, %v171
    %205 = vmatprep.subr.bf16.mxu0 %v62
    %206 = vmatpush1.bf16.msra.mxu0 %v61
    %207 = vmatprep.subr.bf16.mxu0 %v64
    %208 = vmatpush1.bf16.msra.mxu0 %v63
    %209 = vmatprep.subr.bf16.mxu0 %v66
    %210 = vmatpush1.bf16.msra.mxu0 %v65
    %211 = vmatprep.subr.bf16.mxu0 %v68
    %212 = vmatpush1.bf16.msra.mxu0 %v67
    %213 = vmatprep.subr.bf16.mxu0 %v70
    %214 = vmatpush1.bf16.msra.mxu0 %v69
    %215 = vmatprep.subr.bf16.mxu0 %v72
    %216 = vmatpush1.bf16.msra.mxu0 %v71
    %217 = vmatprep.subr.bf16.mxu0 %v74
    %218 = vmatpush1.bf16.msra.mxu0 %v73
    %219 = vmatprep.subr.bf16.mxu0 %v76
    %220 = vmatpush1.bf16.msra.mxu0 %v75
    %221 = vmatprep.subr.bf16.mxu0 0
    %222 = vmatpush1.bf16.msra.mxu0 0
    %223 = vmatprep.subr.bf16.mxu0 0
    %224 = vmatpush1.bf16.msra.mxu0 0
    %225 = vmatprep.subr.bf16.mxu0 0
    %226 = vmatpush1.bf16.msra.mxu0 0
    %227 = vmatprep.subr.bf16.mxu0 0
    %228 = vmatpush1.bf16.msra.mxu0 0
    %229 = vmatprep.subr.bf16.mxu0 0
    %230 = vmatpush1.bf16.msra.mxu0 0
    %231 = vmatprep.subr.bf16.mxu0 0
    %232 = vmatpush1.bf16.msra.mxu0 0
    %233 = vmatprep.subr.bf16.mxu0 0
    %234 = vmatpush1.bf16.msra.mxu0 0
    %235 = vmatprep.subr.bf16.mxu0 0
    %236 = vmatpush1.bf16.msra.mxu0 0
    %237 = vmatprep.mubr.bf16.mxu0 0
    %238 = vmatmul.mubr.bf16.gmra.mrb[0].mxu0 %v173
    %v239 = vpop.f32.mrb[0].mxu0
    %v240 = vadd.f32 0.0, %v239
    %v241 = vpop.f32.mrb[0].mxu0
    %v242 = vadd.f32 0.0, %v241
    %v243 = vpop.f32.mrb[0].mxu0
    %v244 = vadd.f32 0.0, %v243
    %v245 = vpop.f32.mrb[0].mxu0
    %v246 = vadd.f32 0.0, %v245
    %247 = vmatprep.mubr.bf16.mxu0 0
    %248 = vmatmul.mubr.bf16.gmra.mrb[0].mxu0 %v174
    %v249 = vpop.f32.mrb[0].mxu0
    %v250 = vadd.f32 0.0, %v249
    %v251 = vpop.f32.mrb[0].mxu0
    %v252 = vadd.f32 0.0, %v251
    %v253 = vpop.f32.mrb[0].mxu0
    %v254 = vadd.f32 0.0, %v253
    %v255 = vpop.f32.mrb[0].mxu0
    %v256 = vadd.f32 0.0, %v255
    %257 = vmatprep.mubr.bf16.mxu0 0
    %258 = vmatmul.mubr.bf16.gmra.mrb[0].mxu0 %v175
    %v259 = vpop.f32.mrb[0].mxu0
    %v260 = vadd.f32 0.0, %v259
    %v261 = vpop.f32.mrb[0].mxu0
    %v262 = vadd.f32 0.0, %v261
    %v263 = vpop.f32.mrb[0].mxu0
    %v264 = vadd.f32 0.0, %v263
    %v265 = vpop.f32.mrb[0].mxu0
    %v266 = vadd.f32 0.0, %v265
    %267 = vmatprep.mubr.bf16.mxu0 0
    %268 = vmatmul.mubr.bf16.gmra.mrb[0].mxu0 %v176
    %v269 = vpop.f32.mrb[0].mxu0
    %v270 = vadd.f32 0.0, %v269
    %v271 = vpop.f32.mrb[0].mxu0
    %v272 = vadd.f32 0.0, %v271
    %v273 = vpop.f32.mrb[0].mxu0
    %v274 = vadd.f32 0.0, %v273
    %v275 = vpop.f32.mrb[0].mxu0
    %v276 = vadd.f32 0.0, %v275
    %277 = vmatprep.mubr.bf16.mxu0 0
    %278 = vmatmul.mubr.bf16.gmra.mrb[0].mxu0 %v177
    %v279 = vpop.f32.mrb[0].mxu0
    %v280 = vadd.f32 0.0, %v279
    %v281 = vpop.f32.mrb[0].mxu0
    %v282 = vadd.f32 0.0, %v281
    %v283 = vpop.f32.mrb[0].mxu0
    %v284 = vadd.f32 0.0, %v283
    %v285 = vpop.f32.mrb[0].mxu0
    %v286 = vadd.f32 0.0, %v285
    %287 = vmatprep.mubr.bf16.mxu0 0
    %288 = vmatmul.mubr.bf16.gmra.mrb[0].mxu0 %v178
    %v289 = vpop.f32.mrb[0].mxu0
    %v290 = vadd.f32 0.0, %v289
    %v291 = vpop.f32.mrb[0].mxu0
    %v292 = vadd.f32 0.0, %v291
    %v293 = vpop.f32.mrb[0].mxu0
    %v294 = vadd.f32 0.0, %v293
    %v295 = vpop.f32.mrb[0].mxu0
    %v296 = vadd.f32 0.0, %v295
    %297 = vmatprep.mubr.bf16.mxu0 0
    %298 = vmatmul.mubr.bf16.gmra.mrb[0].mxu0 %v179
    %v299 = vpop.f32.mrb[0].mxu0
    %v300 = vadd.f32 0.0, %v299
    %v301 = vpop.f32.mrb[0].mxu0
    %v302 = vadd.f32 0.0, %v301
    %v303 = vpop.f32.mrb[0].mxu0
    %v304 = vadd.f32 0.0, %v303
    %v305 = vpop.f32.mrb[0].mxu0
    %v306 = vadd.f32 0.0, %v305
    %307 = vmatprep.mubr.bf16.mxu0 0
    %308 = vmatmul.mubr.bf16.gmra.mrb[0].mxu0 %v180
    %v309 = vpop.f32.mrb[0].mxu0
    %v310 = vadd.f32 0.0, %v309
    %v311 = vpop.f32.mrb[0].mxu0
    %v312 = vadd.f32 0.0, %v311
    %v313 = vpop.f32.mrb[0].mxu0
    %v314 = vadd.f32 0.0, %v313
    %v315 = vpop.f32.mrb[0].mxu0
    %v316 = vadd.f32 0.0, %v315
    %317 = vmatprep.mubr.bf16.mxu0 0
    %318 = vmatmul.mubr.bf16.gmra.mrb[0].mxu0 %v181
    %v319 = vpop.f32.mrb[0].mxu0
    %v320 = vadd.f32 0.0, %v319
    %v321 = vpop.f32.mrb[0].mxu0
    %v322 = vadd.f32 0.0, %v321
    %v323 = vpop.f32.mrb[0].mxu0
    %v324 = vadd.f32 0.0, %v323
    %v325 = vpop.f32.mrb[0].mxu0
    %v326 = vadd.f32 0.0, %v325
    %327 = vmatprep.mubr.bf16.mxu0 0
    %328 = vmatmul.mubr.bf16.gmra.mrb[0].mxu0 %v182
    %v329 = vpop.f32.mrb[0].mxu0
    %v330 = vadd.f32 0.0, %v329
    %v331 = vpop.f32.mrb[0].mxu0
    %v332 = vadd.f32 0.0, %v331
    %v333 = vpop.f32.mrb[0].mxu0
    %v334 = vadd.f32 0.0, %v333
    %v335 = vpop.f32.mrb[0].mxu0
    %v336 = vadd.f32 0.0, %v335
    %337 = vmatprep.mubr.bf16.mxu0 0
    %338 = vmatmul.mubr.bf16.gmra.mrb[0].mxu0 %v183
    %v339 = vpop.f32.mrb[0].mxu0
    %v340 = vadd.f32 0.0, %v339
    %v341 = vpop.f32.mrb[0].mxu0
    %v342 = vadd.f32 0.0, %v341
    %v343 = vpop.f32.mrb[0].mxu0
    %v344 = vadd.f32 0.0, %v343
    %v345 = vpop.f32.mrb[0].mxu0
    %v346 = vadd.f32 0.0, %v345
    %347 = vmatprep.mubr.bf16.mxu0 0
    %348 = vmatmul.mubr.bf16.gmra.mrb[0].mxu0 %v184
    %v349 = vpop.f32.mrb[0].mxu0
    %v350 = vadd.f32 0.0, %v349
    %v351 = vpop.f32.mrb[0].mxu0
    %v352 = vadd.f32 0.0, %v351
    %v353 = vpop.f32.mrb[0].mxu0
    %v354 = vadd.f32 0.0, %v353
    %v355 = vpop.f32.mrb[0].mxu0
    %v356 = vadd.f32 0.0, %v355
    %357 = vmatprep.mubr.bf16.mxu0 0
    %358 = vmatmul.mubr.bf16.gmra.mrb[0].mxu0 %v185
    %v359 = vpop.f32.mrb[0].mxu0
    %v360 = vadd.f32 0.0, %v359
    %v361 = vpop.f32.mrb[0].mxu0
    %v362 = vadd.f32 0.0, %v361
    %v363 = vpop.f32.mrb[0].mxu0
    %v364 = vadd.f32 0.0, %v363
    %v365 = vpop.f32.mrb[0].mxu0
    %v366 = vadd.f32 0.0, %v365
    %367 = vmatprep.mubr.bf16.mxu0 0
    %368 = vmatmul.mubr.bf16.gmra.mrb[0].mxu0 %v186
    %v369 = vpop.f32.mrb[0].mxu0
    %v370 = vadd.f32 0.0, %v369
    %v371 = vpop.f32.mrb[0].mxu0
    %v372 = vadd.f32 0.0, %v371
    %v373 = vpop.f32.mrb[0].mxu0
    %v374 = vadd.f32 0.0, %v373
    %v375 = vpop.f32.mrb[0].mxu0
    %v376 = vadd.f32 0.0, %v375
    %377 = vmatprep.mubr.bf16.mxu0 0
    %378 = vmatmul.mubr.bf16.gmra.mrb[0].mxu0 %v187
    %v379 = vpop.f32.mrb[0].mxu0
    %v380 = vadd.f32 0.0, %v379
    %v381 = vpop.f32.mrb[0].mxu0
    %v382 = vadd.f32 0.0, %v381
    %v383 = vpop.f32.mrb[0].mxu0
    %v384 = vadd.f32 0.0, %v383
    %v385 = vpop.f32.mrb[0].mxu0
    %v386 = vadd.f32 0.0, %v385
    %387 = vmatprep.mubr.bf16.mxu0 0
    %388 = vmatmul.mubr.bf16.gmra.mrb[0].mxu0 %v188
    %v389 = vpop.f32.mrb[0].mxu0
    %v390 = vadd.f32 0.0, %v389
    %v391 = vpop.f32.mrb[0].mxu0
    %v392 = vadd.f32 0.0, %v391
    %v393 = vpop.f32.mrb[0].mxu0
    %v394 = vadd.f32 0.0, %v393
    %v395 = vpop.f32.mrb[0].mxu0
    %v396 = vadd.f32 0.0, %v395
    %397 = vdwg.mxu0
    %v398 = vpack.c.bf16 %v244, %v240
    %v399 = vpack.c.bf16 %v246, %v242
    %v400 = vpack.c.bf16 %v254, %v250
    %v401 = vpack.c.bf16 %v256, %v252
    %v402 = vpack.c.bf16 %v264, %v260
    %v403 = vpack.c.bf16 %v266, %v262
    %v404 = vpack.c.bf16 %v274, %v270
    %v405 = vpack.c.bf16 %v276, %v272
    %v406 = vpack.c.bf16 %v284, %v280
    %v407 = vpack.c.bf16 %v286, %v282
    %v408 = vpack.c.bf16 %v294, %v290
    %v409 = vpack.c.bf16 %v296, %v292
    %v410 = vpack.c.bf16 %v304, %v300
    %v411 = vpack.c.bf16 %v306, %v302
    %v412 = vpack.c.bf16 %v314, %v310
    %v413 = vpack.c.bf16 %v316, %v312
    %v414 = vpack.c.bf16 %v324, %v320
    %v415 = vpack.c.bf16 %v326, %v322
    %v416 = vpack.c.bf16 %v334, %v330
    %v417 = vpack.c.bf16 %v336, %v332
    %v418 = vpack.c.bf16 %v344, %v340
    %v419 = vpack.c.bf16 %v346, %v342
    %v420 = vpack.c.bf16 %v354, %v350
    %v421 = vpack.c.bf16 %v356, %v352
    %v422 = vpack.c.bf16 %v364, %v360
    %v423 = vpack.c.bf16 %v366, %v362
    %v424 = vpack.c.bf16 %v374, %v370
    %v425 = vpack.c.bf16 %v376, %v372
    %v426 = vpack.c.bf16 %v384, %v380
    %v427 = vpack.c.bf16 %v386, %v382
    %v428 = vpack.c.bf16 %v394, %v390
    %v429 = vpack.c.bf16 %v396, %v392
    %v430 = vld [vmem:[%s2] sm:$0xff]
    %v431 = vld [vmem:[%s2 + $0x8] sm:$0xff]
    %v432 = vld [vmem:[%s2 + $0x10] sm:$0xff]
    %v433 = vld [vmem:[%s2 + $0x18] sm:$0xff]
    %v434 = vld [vmem:[%s2 + $0x20] sm:$0xff]
    %v435 = vld [vmem:[%s2 + $0x28] sm:$0xff]
    %v436 = vld [vmem:[%s2 + $0x30] sm:$0xff]
    %v437 = vld [vmem:[%s2 + $0x38] sm:$0xff]
    %v438 = vld [vmem:[%s2 + $0x40] sm:$0xff]
    %v439 = vld [vmem:[%s2 + $0x48] sm:$0xff]
    %v440 = vld [vmem:[%s2 + $0x50] sm:$0xff]
    %v441 = vld [vmem:[%s2 + $0x58] sm:$0xff]
    %v442 = vld [vmem:[%s2 + $0x60] sm:$0xff]
    %v443 = vld [vmem:[%s2 + $0x68] sm:$0xff]
    %v444 = vld [vmem:[%s2 + $0x70] sm:$0xff]
    %v445 = vld [vmem:[%s2 + $0x78] sm:$0xff]
    %v446 = vld [vmem:[%s2 + $0x80] sm:$0xff]
    %v447 = vld [vmem:[%s2 + $0x88] sm:$0xff]
    %v448 = vld [vmem:[%s2 + $0x90] sm:$0xff]
    %v449 = vld [vmem:[%s2 + $0x98] sm:$0xff]
    %v450 = vld [vmem:[%s2 + $0xa0] sm:$0xff]
    %v451 = vld [vmem:[%s2 + $0xa8] sm:$0xff]
    %v452 = vld [vmem:[%s2 + $0xb0] sm:$0xff]
    %v453 = vld [vmem:[%s2 + $0xb8] sm:$0xff]
    %v454 = vld [vmem:[%s2 + $0xc0] sm:$0xff]
    %v455 = vld [vmem:[%s2 + $0xc8] sm:$0xff]
    %v456 = vld [vmem:[%s2 + $0xd0] sm:$0xff]
    %v457 = vld [vmem:[%s2 + $0xd8] sm:$0xff]
    %v458 = vld [vmem:[%s2 + $0xe0] sm:$0xff]
    %v459 = vld [vmem:[%s2 + $0xe8] sm:$0xff]
    %v460 = vld [vmem:[%s2 + $0xf0] sm:$0xff]
    %v461 = vld [vmem:[%s2 + $0xf8] sm:$0xff]
    %v462 = vld [vmem:[%s2 + $0x100] sm:$0xff]
    %v463 = vld [vmem:[%s2 + $0x108] sm:$0xff]
    %v464 = vld [vmem:[%s2 + $0x110] sm:$0xff]
    %v465 = vld [vmem:[%s2 + $0x118] sm:$0xff]
    %v466 = vld [vmem:[%s2 + $0x120] sm:$0xff]
    %v467 = vld [vmem:[%s2 + $0x128] sm:$0xff]
    %v468 = vld [vmem:[%s2 + $0x130] sm:$0xff]
    %v469 = vld [vmem:[%s2 + $0x138] sm:$0xff]
    %v470 = vld [vmem:[%s2 + $0x140] sm:$0xff]
    %v471 = vld [vmem:[%s2 + $0x148] sm:$0xff]
    %v472 = vld [vmem:[%s2 + $0x150] sm:$0xff]
    %v473 = vld [vmem:[%s2 + $0x158] sm:$0xff]
    %v474 = vld [vmem:[%s2 + $0x160] sm:$0xff]
    %v475 = vld [vmem:[%s2 + $0x168] sm:$0xff]
    %v476 = vld [vmem:[%s2 + $0x170] sm:$0xff]
    %v477 = vld [vmem:[%s2 + $0x178] sm:$0xff]
    %v478 = vld [vmem:[%s2 + $0x180] sm:$0xff]
    %v479 = vld [vmem:[%s2 + $0x188] sm:$0xff]
    %v480 = vld [vmem:[%s2 + $0x190] sm:$0xff]
    %v481 = vld [vmem:[%s2 + $0x198] sm:$0xff]
    %v482 = vld [vmem:[%s2 + $0x1a0] sm:$0xff]
    %v483 = vld [vmem:[%s2 + $0x1a8] sm:$0xff]
    %v484 = vld [vmem:[%s2 + $0x1b0] sm:$0xff]
    %v485 = vld [vmem:[%s2 + $0x1b8] sm:$0xff]
    %v486 = vld [vmem:[%s2 + $0x1c0] sm:$0xff]
    %v487 = vld [vmem:[%s2 + $0x1c8] sm:$0xff]
    %v488 = vld [vmem:[%s2 + $0x1d0] sm:$0xff]
    %v489 = vld [vmem:[%s2 + $0x1d8] sm:$0xff]
    %v490 = vld [vmem:[%s2 + $0x1e0] sm:$0xff]
    %v491 = vld [vmem:[%s2 + $0x1e8] sm:$0xff]
    %v492 = vld [vmem:[%s2 + $0x1f0] sm:$0xff]
    %v493 = vld [vmem:[%s2 + $0x1f8] sm:$0xff]
    %v494 = vld [vmem:[%s2 + $0x200] sm:$0xff]
    %v495 = vld [vmem:[%s2 + $0x208] sm:$0xff]
    %v496 = vld [vmem:[%s2 + $0x210] sm:$0xff]
    %v497 = vld [vmem:[%s2 + $0x218] sm:$0xff]
    %v498 = vld [vmem:[%s2 + $0x220] sm:$0xff]
    %v499 = vld [vmem:[%s2 + $0x228] sm:$0xff]
    %v500 = vld [vmem:[%s2 + $0x230] sm:$0xff]
    %v501 = vld [vmem:[%s2 + $0x238] sm:$0xff]
    %v502 = vld [vmem:[%s2 + $0x240] sm:$0xff]
    %v503 = vld [vmem:[%s2 + $0x248] sm:$0xff]
    %v504 = vld [vmem:[%s2 + $0x250] sm:$0xff]
    %v505 = vld [vmem:[%s2 + $0x258] sm:$0xff]
    %v506 = vld [vmem:[%s2 + $0x260] sm:$0xff]
    %v507 = vld [vmem:[%s2 + $0x268] sm:$0xff]
    %v508 = vld [vmem:[%s2 + $0x270] sm:$0xff]
    %v509 = vld [vmem:[%s2 + $0x278] sm:$0xff]
    %v510 = vld [vmem:[%s2 + $0x280] sm:$0xff]
    %v511 = vld [vmem:[%s2 + $0x288] sm:$0xff]
    %v512 = vld [vmem:[%s2 + $0x290] sm:$0xff]
    %v513 = vld [vmem:[%s2 + $0x298] sm:$0xff]
    %v514 = vld [vmem:[%s2 + $0x2a0] sm:$0xff]
    %v515 = vld [vmem:[%s2 + $0x2a8] sm:$0xff]
    %v516 = vld [vmem:[%s2 + $0x2b0] sm:$0xff]
    %v517 = vld [vmem:[%s2 + $0x2b8] sm:$0xff]
    %v518 = vld [vmem:[%s2 + $0x2c0] sm:$0xff]
    %v519 = vld [vmem:[%s2 + $0x2c8] sm:$0xff]
    %v520 = vld [vmem:[%s2 + $0x2d0] sm:$0xff]
    %v521 = vld [vmem:[%s2 + $0x2d8] sm:$0xff]
    %v522 = vld [vmem:[%s2 + $0x2e0] sm:$0xff]
    %v523 = vld [vmem:[%s2 + $0x2e8] sm:$0xff]
    %v524 = vld [vmem:[%s2 + $0x2f0] sm:$0xff]
    %v525 = vld [vmem:[%s2 + $0x2f8] sm:$0xff]
    %v526 = vld [vmem:[%s2 + $0x300] sm:$0xff]
    %v527 = vld [vmem:[%s2 + $0x308] sm:$0xff]
    %v528 = vld [vmem:[%s2 + $0x310] sm:$0xff]
    %v529 = vld [vmem:[%s2 + $0x318] sm:$0xff]
    %v530 = vld [vmem:[%s2 + $0x320] sm:$0xff]
    %v531 = vld [vmem:[%s2 + $0x328] sm:$0xff]
    %v532 = vld [vmem:[%s2 + $0x330] sm:$0xff]
    %v533 = vld [vmem:[%s2 + $0x338] sm:$0xff]
    %v534 = vld [vmem:[%s2 + $0x340] sm:$0xff]
    %v535 = vld [vmem:[%s2 + $0x348] sm:$0xff]
    %v536 = vld [vmem:[%s2 + $0x350] sm:$0xff]
    %v537 = vld [vmem:[%s2 + $0x358] sm:$0xff]
    %v538 = vld [vmem:[%s2 + $0x360] sm:$0xff]
    %v539 = vld [vmem:[%s2 + $0x368] sm:$0xff]
    %v540 = vld [vmem:[%s2 + $0x370] sm:$0xff]
    %v541 = vld [vmem:[%s2 + $0x378] sm:$0xff]
    %v542 = vld [vmem:[%s2 + $0x380] sm:$0xff]
    %v543 = vld [vmem:[%s2 + $0x388] sm:$0xff]
    %v544 = vld [vmem:[%s2 + $0x390] sm:$0xff]
    %v545 = vld [vmem:[%s2 + $0x398] sm:$0xff]
    %v546 = vld [vmem:[%s2 + $0x3a0] sm:$0xff]
    %v547 = vld [vmem:[%s2 + $0x3a8] sm:$0xff]
    %v548 = vld [vmem:[%s2 + $0x3b0] sm:$0xff]
    %v549 = vld [vmem:[%s2 + $0x3b8] sm:$0xff]
    %v550 = vld [vmem:[%s2 + $0x3c0] sm:$0xff]
    %v551 = vld [vmem:[%s2 + $0x3c8] sm:$0xff]
    %v552 = vld [vmem:[%s2 + $0x3d0] sm:$0xff]
    %v553 = vld [vmem:[%s2 + $0x3d8] sm:$0xff]
    %v554 = vld [vmem:[%s2 + $0x3e0] sm:$0xff]
    %v555 = vld [vmem:[%s2 + $0x3e8] sm:$0xff]
    %v556 = vld [vmem:[%s2 + $0x3f0] sm:$0xff]
    %v557 = vld [vmem:[%s2 + $0x3f8] sm:$0xff]
    %v686 = vunpack.c.l.b16 %v430
    %v687 = vunpack.c.h.b16 %v430
    %v688 = vunpack.c.l.b16 %v431
    %v689 = vunpack.c.h.b16 %v431
    %v690 = vunpack.c.l.b16 %v432
    %v691 = vunpack.c.h.b16 %v432
    %v692 = vunpack.c.l.b16 %v433
    %v693 = vunpack.c.h.b16 %v433
    %v694 = vunpack.c.l.b16 %v434
    %v695 = vunpack.c.h.b16 %v434
    %v696 = vunpack.c.l.b16 %v435
    %v697 = vunpack.c.h.b16 %v435
    %v698 = vunpack.c.l.b16 %v436
    %v699 = vunpack.c.h.b16 %v436
    %v700 = vunpack.c.l.b16 %v437
    %v701 = vunpack.c.h.b16 %v437
    %v702 = vunpack.c.l.b16 %v438
    %v703 = vunpack.c.h.b16 %v438
    %v704 = vunpack.c.l.b16 %v439
    %v705 = vunpack.c.h.b16 %v439
    %v706 = vunpack.c.l.b16 %v440
    %v707 = vunpack.c.h.b16 %v440
    %v708 = vunpack.c.l.b16 %v441
    %v709 = vunpack.c.h.b16 %v441
    %v710 = vunpack.c.l.b16 %v442
    %v711 = vunpack.c.h.b16 %v442
    %v712 = vunpack.c.l.b16 %v443
    %v713 = vunpack.c.h.b16 %v443
    %v714 = vunpack.c.l.b16 %v444
    %v715 = vunpack.c.h.b16 %v444
    %v716 = vunpack.c.l.b16 %v445
    %v717 = vunpack.c.h.b16 %v445
    %v718 = vunpack.c.l.b16 %v446
    %v719 = vunpack.c.h.b16 %v446
    %v720 = vunpack.c.l.b16 %v447
    %v721 = vunpack.c.h.b16 %v447
    %v722 = vunpack.c.l.b16 %v448
    %v723 = vunpack.c.h.b16 %v448
    %v724 = vunpack.c.l.b16 %v449
    %v725 = vunpack.c.h.b16 %v449
    %v726 = vunpack.c.l.b16 %v450
    %v727 = vunpack.c.h.b16 %v450
    %v728 = vunpack.c.l.b16 %v451
    %v729 = vunpack.c.h.b16 %v451
    %v730 = vunpack.c.l.b16 %v452
    %v731 = vunpack.c.h.b16 %v452
    %v732 = vunpack.c.l.b16 %v453
    %v733 = vunpack.c.h.b16 %v453
    %v734 = vunpack.c.l.b16 %v454
    %v735 = vunpack.c.h.b16 %v454
    %v736 = vunpack.c.l.b16 %v455
    %v737 = vunpack.c.h.b16 %v455
    %v738 = vunpack.c.l.b16 %v456
    %v739 = vunpack.c.h.b16 %v456
    %v740 = vunpack.c.l.b16 %v457
    %v741 = vunpack.c.h.b16 %v457
    %v742 = vunpack.c.l.b16 %v458
    %v743 = vunpack.c.h.b16 %v458
    %v744 = vunpack.c.l.b16 %v459
    %v745 = vunpack.c.h.b16 %v459
    %v746 = vunpack.c.l.b16 %v460
    %v747 = vunpack.c.h.b16 %v460
    %v748 = vunpack.c.l.b16 %v461
    %v749 = vunpack.c.h.b16 %v461
    %v750 = vunpack.c.l.b16 %v462
    %v751 = vunpack.c.h.b16 %v462
    %v752 = vunpack.c.l.b16 %v463
    %v753 = vunpack.c.h.b16 %v463
    %v754 = vunpack.c.l.b16 %v464
    %v755 = vunpack.c.h.b16 %v464
    %v756 = vunpack.c.l.b16 %v465
    %v757 = vunpack.c.h.b16 %v465
    %v758 = vunpack.c.l.b16 %v466
    %v759 = vunpack.c.h.b16 %v466
    %v760 = vunpack.c.l.b16 %v467
    %v761 = vunpack.c.h.b16 %v467
    %v762 = vunpack.c.l.b16 %v468
    %v763 = vunpack.c.h.b16 %v468
    %v764 = vunpack.c.l.b16 %v469
    %v765 = vunpack.c.h.b16 %v469
    %v766 = vunpack.c.l.b16 %v470
    %v767 = vunpack.c.h.b16 %v470
    %v768 = vunpack.c.l.b16 %v471
    %v769 = vunpack.c.h.b16 %v471
    %v770 = vunpack.c.l.b16 %v472
    %v771 = vunpack.c.h.b16 %v472
    %v772 = vunpack.c.l.b16 %v473
    %v773 = vunpack.c.h.b16 %v473
    %v774 = vunpack.c.l.b16 %v474
    %v775 = vunpack.c.h.b16 %v474
    %v776 = vunpack.c.l.b16 %v475
    %v777 = vunpack.c.h.b16 %v475
    %v778 = vunpack.c.l.b16 %v476
    %v779 = vunpack.c.h.b16 %v476
    %v780 = vunpack.c.l.b16 %v477
    %v781 = vunpack.c.h.b16 %v477
    %v782 = vunpack.c.l.b16 %v478
    %v783 = vunpack.c.h.b16 %v478
    %v784 = vunpack.c.l.b16 %v479
    %v785 = vunpack.c.h.b16 %v479
    %v786 = vunpack.c.l.b16 %v480
    %v787 = vunpack.c.h.b16 %v480
    %v788 = vunpack.c.l.b16 %v481
    %v789 = vunpack.c.h.b16 %v481
    %v790 = vunpack.c.l.b16 %v482
    %v791 = vunpack.c.h.b16 %v482
    %v792 = vunpack.c.l.b16 %v483
    %v793 = vunpack.c.h.b16 %v483
    %v794 = vunpack.c.l.b16 %v484
    %v795 = vunpack.c.h.b16 %v484
    %v796 = vunpack.c.l.b16 %v485
    %v797 = vunpack.c.h.b16 %v485
    %v798 = vunpack.c.l.b16 %v486
    %v799 = vunpack.c.h.b16 %v486
    %v800 = vunpack.c.l.b16 %v487
    %v801 = vunpack.c.h.b16 %v487
    %v802 = vunpack.c.l.b16 %v488
    %v803 = vunpack.c.h.b16 %v488
    %v804 = vunpack.c.l.b16 %v489
    %v805 = vunpack.c.h.b16 %v489
    %v806 = vunpack.c.l.b16 %v490
    %v807 = vunpack.c.h.b16 %v490
    %v808 = vunpack.c.l.b16 %v491
    %v809 = vunpack.c.h.b16 %v491
    %v810 = vunpack.c.l.b16 %v492
    %v811 = vunpack.c.h.b16 %v492
    %v812 = vunpack.c.l.b16 %v493
    %v813 = vunpack.c.h.b16 %v493
    %v814 = vunpack.c.l.b16 %v494
    %v815 = vunpack.c.h.b16 %v494
    %v816 = vunpack.c.l.b16 %v495
    %v817 = vunpack.c.h.b16 %v495
    %v818 = vunpack.c.l.b16 %v496
    %v819 = vunpack.c.h.b16 %v496
    %v820 = vunpack.c.l.b16 %v497
    %v821 = vunpack.c.h.b16 %v497
    %v822 = vunpack.c.l.b16 %v498
    %v823 = vunpack.c.h.b16 %v498
    %v824 = vunpack.c.l.b16 %v499
    %v825 = vunpack.c.h.b16 %v499
    %v826 = vunpack.c.l.b16 %v500
    %v827 = vunpack.c.h.b16 %v500
    %v828 = vunpack.c.l.b16 %v501
    %v829 = vunpack.c.h.b16 %v501
    %v830 = vunpack.c.l.b16 %v502
    %v831 = vunpack.c.h.b16 %v502
    %v832 = vunpack.c.l.b16 %v503
    %v833 = vunpack.c.h.b16 %v503
    %v834 = vunpack.c.l.b16 %v504
    %v835 = vunpack.c.h.b16 %v504
    %v836 = vunpack.c.l.b16 %v505
    %v837 = vunpack.c.h.b16 %v505
    %v838 = vunpack.c.l.b16 %v506
    %v839 = vunpack.c.h.b16 %v506
    %v840 = vunpack.c.l.b16 %v507
    %v841 = vunpack.c.h.b16 %v507
    %v842 = vunpack.c.l.b16 %v508
    %v843 = vunpack.c.h.b16 %v508
    %v844 = vunpack.c.l.b16 %v509
    %v845 = vunpack.c.h.b16 %v509
    %v846 = vunpack.c.l.b16 %v510
    %v847 = vunpack.c.h.b16 %v510
    %v848 = vunpack.c.l.b16 %v511
    %v849 = vunpack.c.h.b16 %v511
    %v850 = vunpack.c.l.b16 %v512
    %v851 = vunpack.c.h.b16 %v512
    %v852 = vunpack.c.l.b16 %v513
    %v853 = vunpack.c.h.b16 %v513
    %v854 = vunpack.c.l.b16 %v514
    %v855 = vunpack.c.h.b16 %v514
    %v856 = vunpack.c.l.b16 %v515
    %v857 = vunpack.c.h.b16 %v515
    %v858 = vunpack.c.l.b16 %v516
    %v859 = vunpack.c.h.b16 %v516
    %v860 = vunpack.c.l.b16 %v517
    %v861 = vunpack.c.h.b16 %v517
    %v862 = vunpack.c.l.b16 %v518
    %v863 = vunpack.c.h.b16 %v518
    %v864 = vunpack.c.l.b16 %v519
    %v865 = vunpack.c.h.b16 %v519
    %v866 = vunpack.c.l.b16 %v520
    %v867 = vunpack.c.h.b16 %v520
    %v868 = vunpack.c.l.b16 %v521
    %v869 = vunpack.c.h.b16 %v521
    %v870 = vunpack.c.l.b16 %v522
    %v871 = vunpack.c.h.b16 %v522
    %v872 = vunpack.c.l.b16 %v523
    %v873 = vunpack.c.h.b16 %v523
    %v874 = vunpack.c.l.b16 %v524
    %v875 = vunpack.c.h.b16 %v524
    %v876 = vunpack.c.l.b16 %v525
    %v877 = vunpack.c.h.b16 %v525
    %v878 = vunpack.c.l.b16 %v526
    %v879 = vunpack.c.h.b16 %v526
    %v880 = vunpack.c.l.b16 %v527
    %v881 = vunpack.c.h.b16 %v527
    %v882 = vunpack.c.l.b16 %v528
    %v883 = vunpack.c.h.b16 %v528
    %v884 = vunpack.c.l.b16 %v529
    %v885 = vunpack.c.h.b16 %v529
    %v886 = vunpack.c.l.b16 %v530
    %v887 = vunpack.c.h.b16 %v530
    %v888 = vunpack.c.l.b16 %v531
    %v889 = vunpack.c.h.b16 %v531
    %v890 = vunpack.c.l.b16 %v532
    %v891 = vunpack.c.h.b16 %v532
    %v892 = vunpack.c.l.b16 %v533
    %v893 = vunpack.c.h.b16 %v533
    %v894 = vunpack.c.l.b16 %v534
    %v895 = vunpack.c.h.b16 %v534
    %v896 = vunpack.c.l.b16 %v535
    %v897 = vunpack.c.h.b16 %v535
    %v898 = vunpack.c.l.b16 %v536
    %v899 = vunpack.c.h.b16 %v536
    %v900 = vunpack.c.l.b16 %v537
    %v901 = vunpack.c.h.b16 %v537
    %v902 = vunpack.c.l.b16 %v538
    %v903 = vunpack.c.h.b16 %v538
    %v904 = vunpack.c.l.b16 %v539
    %v905 = vunpack.c.h.b16 %v539
    %v906 = vunpack.c.l.b16 %v540
    %v907 = vunpack.c.h.b16 %v540
    %v908 = vunpack.c.l.b16 %v541
    %v909 = vunpack.c.h.b16 %v541
    %v910 = vunpack.c.l.b16 %v542
    %v911 = vunpack.c.h.b16 %v542
    %v912 = vunpack.c.l.b16 %v543
    %v913 = vunpack.c.h.b16 %v543
    %v914 = vunpack.c.l.b16 %v544
    %v915 = vunpack.c.h.b16 %v544
    %v916 = vunpack.c.l.b16 %v545
    %v917 = vunpack.c.h.b16 %v545
    %v918 = vunpack.c.l.b16 %v546
    %v919 = vunpack.c.h.b16 %v546
    %v920 = vunpack.c.l.b16 %v547
    %v921 = vunpack.c.h.b16 %v547
    %v922 = vunpack.c.l.b16 %v548
    %v923 = vunpack.c.h.b16 %v548
    %v924 = vunpack.c.l.b16 %v549
    %v925 = vunpack.c.h.b16 %v549
    %v926 = vunpack.c.l.b16 %v550
    %v927 = vunpack.c.h.b16 %v550
    %v928 = vunpack.c.l.b16 %v551
    %v929 = vunpack.c.h.b16 %v551
    %v930 = vunpack.c.l.b16 %v552
    %v931 = vunpack.c.h.b16 %v552
    %v932 = vunpack.c.l.b16 %v553
    %v933 = vunpack.c.h.b16 %v553
    %v934 = vunpack.c.l.b16 %v554
    %v935 = vunpack.c.h.b16 %v554
    %v936 = vunpack.c.l.b16 %v555
    %v937 = vunpack.c.h.b16 %v555
    %v938 = vunpack.c.l.b16 %v556
    %v939 = vunpack.c.h.b16 %v556
    %v940 = vunpack.c.l.b16 %v557
    %v941 = vunpack.c.h.b16 %v557
    %v942 = vpack.c.b16 %v694, %v686
    %v943 = vpack.c.b16 %v695, %v687
    %v944 = vpack.c.b16 %v696, %v688
    %v945 = vpack.c.b16 %v697, %v689
    %v946 = vpack.c.b16 %v698, %v690
    %v947 = vpack.c.b16 %v699, %v691
    %v948 = vpack.c.b16 %v700, %v692
    %v949 = vpack.c.b16 %v701, %v693
    %v950 = vpack.c.b16 %v710, %v702
    %v951 = vpack.c.b16 %v711, %v703
    %v952 = vpack.c.b16 %v712, %v704
    %v953 = vpack.c.b16 %v713, %v705
    %v954 = vpack.c.b16 %v714, %v706
    %v955 = vpack.c.b16 %v715, %v707
    %v956 = vpack.c.b16 %v716, %v708
    %v957 = vpack.c.b16 %v717, %v709
    %v958 = vpack.c.b16 %v726, %v718
    %v959 = vpack.c.b16 %v727, %v719
    %v960 = vpack.c.b16 %v728, %v720
    %v961 = vpack.c.b16 %v729, %v721
    %v962 = vpack.c.b16 %v730, %v722
    %v963 = vpack.c.b16 %v731, %v723
    %v964 = vpack.c.b16 %v732, %v724
    %v965 = vpack.c.b16 %v733, %v725
    %v966 = vpack.c.b16 %v742, %v734
    %v967 = vpack.c.b16 %v743, %v735
    %v968 = vpack.c.b16 %v744, %v736
    %v969 = vpack.c.b16 %v745, %v737
    %v970 = vpack.c.b16 %v746, %v738
    %v971 = vpack.c.b16 %v747, %v739
    %v972 = vpack.c.b16 %v748, %v740
    %v973 = vpack.c.b16 %v749, %v741
    %v974 = vpack.c.b16 %v758, %v750
    %v975 = vpack.c.b16 %v759, %v751
    %v976 = vpack.c.b16 %v760, %v752
    %v977 = vpack.c.b16 %v761, %v753
    %v978 = vpack.c.b16 %v762, %v754
    %v979 = vpack.c.b16 %v763, %v755
    %v980 = vpack.c.b16 %v764, %v756
    %v981 = vpack.c.b16 %v765, %v757
    %v982 = vpack.c.b16 %v774, %v766
    %v983 = vpack.c.b16 %v775, %v767
    %v984 = vpack.c.b16 %v776, %v768
    %v985 = vpack.c.b16 %v777, %v769
    %v986 = vpack.c.b16 %v778, %v770
    %v987 = vpack.c.b16 %v779, %v771
    %v988 = vpack.c.b16 %v780, %v772
    %v989 = vpack.c.b16 %v781, %v773
    %v990 = vpack.c.b16 %v790, %v782
    %v991 = vpack.c.b16 %v791, %v783
    %v992 = vpack.c.b16 %v792, %v784
    %v993 = vpack.c.b16 %v793, %v785
    %v994 = vpack.c.b16 %v794, %v786
    %v995 = vpack.c.b16 %v795, %v787
    %v996 = vpack.c.b16 %v796, %v788
    %v997 = vpack.c.b16 %v797, %v789
    %v998 = vpack.c.b16 %v806, %v798
    %v999 = vpack.c.b16 %v807, %v799
    %v1000 = vpack.c.b16 %v808, %v800
    %v1001 = vpack.c.b16 %v809, %v801
    %v1002 = vpack.c.b16 %v810, %v802
    %v1003 = vpack.c.b16 %v811, %v803
    %v1004 = vpack.c.b16 %v812, %v804
    %v1005 = vpack.c.b16 %v813, %v805
    %v1006 = vpack.c.b16 %v822, %v814
    %v1007 = vpack.c.b16 %v823, %v815
    %v1008 = vpack.c.b16 %v824, %v816
    %v1009 = vpack.c.b16 %v825, %v817
    %v1010 = vpack.c.b16 %v826, %v818
    %v1011 = vpack.c.b16 %v827, %v819
    %v1012 = vpack.c.b16 %v828, %v820
    %v1013 = vpack.c.b16 %v829, %v821
    %v1014 = vpack.c.b16 %v838, %v830
    %v1015 = vpack.c.b16 %v839, %v831
    %v1016 = vpack.c.b16 %v840, %v832
    %v1017 = vpack.c.b16 %v841, %v833
    %v1018 = vpack.c.b16 %v842, %v834
    %v1019 = vpack.c.b16 %v843, %v835
    %v1020 = vpack.c.b16 %v844, %v836
    %v1021 = vpack.c.b16 %v845, %v837
    %v1022 = vpack.c.b16 %v854, %v846
    %v1023 = vpack.c.b16 %v855, %v847
    %v1024 = vpack.c.b16 %v856, %v848
    %v1025 = vpack.c.b16 %v857, %v849
    %v1026 = vpack.c.b16 %v858, %v850
    %v1027 = vpack.c.b16 %v859, %v851
    %v1028 = vpack.c.b16 %v860, %v852
    %v1029 = vpack.c.b16 %v861, %v853
    %v1030 = vpack.c.b16 %v870, %v862
    %v1031 = vpack.c.b16 %v871, %v863
    %v1032 = vpack.c.b16 %v872, %v864
    %v1033 = vpack.c.b16 %v873, %v865
    %v1034 = vpack.c.b16 %v874, %v866
    %v1035 = vpack.c.b16 %v875, %v867
    %v1036 = vpack.c.b16 %v876, %v868
    %v1037 = vpack.c.b16 %v877, %v869
    %v1038 = vpack.c.b16 %v886, %v878
    %v1039 = vpack.c.b16 %v887, %v879
    %v1040 = vpack.c.b16 %v888, %v880
    %v1041 = vpack.c.b16 %v889, %v881
    %v1042 = vpack.c.b16 %v890, %v882
    %v1043 = vpack.c.b16 %v891, %v883
    %v1044 = vpack.c.b16 %v892, %v884
    %v1045 = vpack.c.b16 %v893, %v885
    %v1046 = vpack.c.b16 %v902, %v894
    %v1047 = vpack.c.b16 %v903, %v895
    %v1048 = vpack.c.b16 %v904, %v896
    %v1049 = vpack.c.b16 %v905, %v897
    %v1050 = vpack.c.b16 %v906, %v898
    %v1051 = vpack.c.b16 %v907, %v899
    %v1052 = vpack.c.b16 %v908, %v900
    %v1053 = vpack.c.b16 %v909, %v901
    %v1054 = vpack.c.b16 %v918, %v910
    %v1055 = vpack.c.b16 %v919, %v911
    %v1056 = vpack.c.b16 %v920, %v912
    %v1057 = vpack.c.b16 %v921, %v913
    %v1058 = vpack.c.b16 %v922, %v914
    %v1059 = vpack.c.b16 %v923, %v915
    %v1060 = vpack.c.b16 %v924, %v916
    %v1061 = vpack.c.b16 %v925, %v917
    %v1062 = vpack.c.b16 %v934, %v926
    %v1063 = vpack.c.b16 %v935, %v927
    %v1064 = vpack.c.b16 %v936, %v928
    %v1065 = vpack.c.b16 %v937, %v929
    %v1066 = vpack.c.b16 %v938, %v930
    %v1067 = vpack.c.b16 %v939, %v931
    %v1068 = vpack.c.b16 %v940, %v932
    %v1069 = vpack.c.b16 %v941, %v933
    %1198 = vmatprep.subr.bf16.mxu0 %v943
    %1199 = vmatpush1.bf16.msra.mxu0 %v942
    %1200 = vmatprep.subr.bf16.mxu0 %v951
    %1201 = vmatpush1.bf16.msra.mxu0 %v950
    %1202 = vmatprep.subr.bf16.mxu0 %v959
    %1203 = vmatpush1.bf16.msra.mxu0 %v958
    %1204 = vmatprep.subr.bf16.mxu0 %v967
    %1205 = vmatpush1.bf16.msra.mxu0 %v966
    %1206 = vmatprep.subr.bf16.mxu0 %v975
    %1207 = vmatpush1.bf16.msra.mxu0 %v974
    %1208 = vmatprep.subr.bf16.mxu0 %v983
    %1209 = vmatpush1.bf16.msra.mxu0 %v982
    %1210 = vmatprep.subr.bf16.mxu0 %v991
    %1211 = vmatpush1.bf16.msra.mxu0 %v990
    %1212 = vmatprep.subr.bf16.mxu0 %v999
    %1213 = vmatpush1.bf16.msra.mxu0 %v998
    %1214 = vmatprep.subr.bf16.mxu0 %v1007
    %1215 = vmatpush1.bf16.msra.mxu0 %v1006
    %1216 = vmatprep.subr.bf16.mxu0 %v1015
    %1217 = vmatpush1.bf16.msra.mxu0 %v1014
    %1218 = vmatprep.subr.bf16.mxu0 %v1023
    %1219 = vmatpush1.bf16.msra.mxu0 %v1022
    %1220 = vmatprep.subr.bf16.mxu0 %v1031
    %1221 = vmatpush1.bf16.msra.mxu0 %v1030
    %1222 = vmatprep.subr.bf16.mxu0 %v1039
    %1223 = vmatpush1.bf16.msra.mxu0 %v1038
    %1224 = vmatprep.subr.bf16.mxu0 %v1047
    %1225 = vmatpush1.bf16.msra.mxu0 %v1046
    %1226 = vmatprep.subr.bf16.mxu0 %v1055
    %1227 = vmatpush1.bf16.msra.mxu0 %v1054
    %1228 = vmatprep.subr.bf16.mxu0 %v1063
    %1229 = vmatpush1.bf16.msra.mxu0 %v1062
    %1230 = vmatprep.mubr.bf16.mxu0 %v399
    %1231 = vmatmul.mubr.bf16.gmra.mrb[0].mxu0 %v398
    %v1232 = vpop.f32.mrb[0].mxu0
    %v1233 = vadd.f32 0.0, %v1232
    %v1234 = vpop.f32.mrb[0].mxu0
    %v1235 = vadd.f32 0.0, %v1234
    %v1236 = vpop.f32.mrb[0].mxu0
    %v1237 = vadd.f32 0.0, %v1236
    %v1238 = vpop.f32.mrb[0].mxu0
    %v1239 = vadd.f32 0.0, %v1238
    %1240 = vmatprep.mubr.bf16.mxu0 %v401
    %1241 = vmatmul.mubr.bf16.gmra.mrb[0].mxu0 %v400
    %v1242 = vpop.f32.mrb[0].mxu0
    %v1243 = vadd.f32 0.0, %v1242
    %v1244 = vpop.f32.mrb[0].mxu0
    %v1245 = vadd.f32 0.0, %v1244
    %v1246 = vpop.f32.mrb[0].mxu0
    %v1247 = vadd.f32 0.0, %v1246
    %v1248 = vpop.f32.mrb[0].mxu0
    %v1249 = vadd.f32 0.0, %v1248
    %1250 = vmatprep.mubr.bf16.mxu0 %v403
    %1251 = vmatmul.mubr.bf16.gmra.mrb[0].mxu0 %v402
    %v1252 = vpop.f32.mrb[0].mxu0
    %v1253 = vadd.f32 0.0, %v1252
    %v1254 = vpop.f32.mrb[0].mxu0
    %v1255 = vadd.f32 0.0, %v1254
    %v1256 = vpop.f32.mrb[0].mxu0
    %v1257 = vadd.f32 0.0, %v1256
    %v1258 = vpop.f32.mrb[0].mxu0
    %v1259 = vadd.f32 0.0, %v1258
    %1260 = vmatprep.mubr.bf16.mxu0 %v405
    %1261 = vmatmul.mubr.bf16.gmra.mrb[0].mxu0 %v404
    %v1262 = vpop.f32.mrb[0].mxu0
    %v1263 = vadd.f32 0.0, %v1262
    %v1264 = vpop.f32.mrb[0].mxu0
    %v1265 = vadd.f32 0.0, %v1264
    %v1266 = vpop.f32.mrb[0].mxu0
    %v1267 = vadd.f32 0.0, %v1266
    %v1268 = vpop.f32.mrb[0].mxu0
    %v1269 = vadd.f32 0.0, %v1268
    %1270 = vmatprep.mubr.bf16.mxu0 %v407
    %1271 = vmatmul.mubr.bf16.gmra.mrb[0].mxu0 %v406
    %v1272 = vpop.f32.mrb[0].mxu0
    %v1273 = vadd.f32 0.0, %v1272
    %v1274 = vpop.f32.mrb[0].mxu0
    %v1275 = vadd.f32 0.0, %v1274
    %v1276 = vpop.f32.mrb[0].mxu0
    %v1277 = vadd.f32 0.0, %v1276
    %v1278 = vpop.f32.mrb[0].mxu0
    %v1279 = vadd.f32 0.0, %v1278
    %1280 = vmatprep.mubr.bf16.mxu0 %v409
    %1281 = vmatmul.mubr.bf16.gmra.mrb[0].mxu0 %v408
    %v1282 = vpop.f32.mrb[0].mxu0
    %v1283 = vadd.f32 0.0, %v1282
    %v1284 = vpop.f32.mrb[0].mxu0
    %v1285 = vadd.f32 0.0, %v1284
    %v1286 = vpop.f32.mrb[0].mxu0
    %v1287 = vadd.f32 0.0, %v1286
    %v1288 = vpop.f32.mrb[0].mxu0
    %v1289 = vadd.f32 0.0, %v1288
    %1290 = vmatprep.mubr.bf16.mxu0 %v411
    %1291 = vmatmul.mubr.bf16.gmra.mrb[0].mxu0 %v410
    %v1292 = vpop.f32.mrb[0].mxu0
    %v1293 = vadd.f32 0.0, %v1292
    %v1294 = vpop.f32.mrb[0].mxu0
    %v1295 = vadd.f32 0.0, %v1294
    %v1296 = vpop.f32.mrb[0].mxu0
    %v1297 = vadd.f32 0.0, %v1296
    %v1298 = vpop.f32.mrb[0].mxu0
    %v1299 = vadd.f32 0.0, %v1298
    %1300 = vmatprep.mubr.bf16.mxu0 %v413
    %1301 = vmatmul.mubr.bf16.gmra.mrb[0].mxu0 %v412
    %v1302 = vpop.f32.mrb[0].mxu0
    %v1303 = vadd.f32 0.0, %v1302
    %v1304 = vpop.f32.mrb[0].mxu0
    %v1305 = vadd.f32 0.0, %v1304
    %v1306 = vpop.f32.mrb[0].mxu0
    %v1307 = vadd.f32 0.0, %v1306
    %v1308 = vpop.f32.mrb[0].mxu0
    %v1309 = vadd.f32 0.0, %v1308
    %1310 = vmatprep.mubr.bf16.mxu0 %v415
    %1311 = vmatmul.mubr.bf16.gmra.mrb[0].mxu0 %v414
    %v1312 = vpop.f32.mrb[0].mxu0
    %v1313 = vadd.f32 0.0, %v1312
    %v1314 = vpop.f32.mrb[0].mxu0
    %v1315 = vadd.f32 0.0, %v1314
    %v1316 = vpop.f32.mrb[0].mxu0
    %v1317 = vadd.f32 0.0, %v1316
    %v1318 = vpop.f32.mrb[0].mxu0
    %v1319 = vadd.f32 0.0, %v1318
    %1320 = vmatprep.mubr.bf16.mxu0 %v417
    %1321 = vmatmul.mubr.bf16.gmra.mrb[0].mxu0 %v416
    %v1322 = vpop.f32.mrb[0].mxu0
    %v1323 = vadd.f32 0.0, %v1322
    %v1324 = vpop.f32.mrb[0].mxu0
    %v1325 = vadd.f32 0.0, %v1324
    %v1326 = vpop.f32.mrb[0].mxu0
    %v1327 = vadd.f32 0.0, %v1326
    %v1328 = vpop.f32.mrb[0].mxu0
    %v1329 = vadd.f32 0.0, %v1328
    %1330 = vmatprep.mubr.bf16.mxu0 %v419
    %1331 = vmatmul.mubr.bf16.gmra.mrb[0].mxu0 %v418
    %v1332 = vpop.f32.mrb[0].mxu0
    %v1333 = vadd.f32 0.0, %v1332
    %v1334 = vpop.f32.mrb[0].mxu0
    %v1335 = vadd.f32 0.0, %v1334
    %v1336 = vpop.f32.mrb[0].mxu0
    %v1337 = vadd.f32 0.0, %v1336
    %v1338 = vpop.f32.mrb[0].mxu0
    %v1339 = vadd.f32 0.0, %v1338
    %1340 = vmatprep.mubr.bf16.mxu0 %v421
    %1341 = vmatmul.mubr.bf16.gmra.mrb[0].mxu0 %v420
    %v1342 = vpop.f32.mrb[0].mxu0
    %v1343 = vadd.f32 0.0, %v1342
    %v1344 = vpop.f32.mrb[0].mxu0
    %v1345 = vadd.f32 0.0, %v1344
    %v1346 = vpop.f32.mrb[0].mxu0
    %v1347 = vadd.f32 0.0, %v1346
    %v1348 = vpop.f32.mrb[0].mxu0
    %v1349 = vadd.f32 0.0, %v1348
    %1350 = vmatprep.mubr.bf16.mxu0 %v423
    %1351 = vmatmul.mubr.bf16.gmra.mrb[0].mxu0 %v422
    %v1352 = vpop.f32.mrb[0].mxu0
    %v1353 = vadd.f32 0.0, %v1352
    %v1354 = vpop.f32.mrb[0].mxu0
    %v1355 = vadd.f32 0.0, %v1354
    %v1356 = vpop.f32.mrb[0].mxu0
    %v1357 = vadd.f32 0.0, %v1356
    %v1358 = vpop.f32.mrb[0].mxu0
    %v1359 = vadd.f32 0.0, %v1358
    %1360 = vmatprep.mubr.bf16.mxu0 %v425
    %1361 = vmatmul.mubr.bf16.gmra.mrb[0].mxu0 %v424
    %v1362 = vpop.f32.mrb[0].mxu0
    %v1363 = vadd.f32 0.0, %v1362
    %v1364 = vpop.f32.mrb[0].mxu0
    %v1365 = vadd.f32 0.0, %v1364
    %v1366 = vpop.f32.mrb[0].mxu0
    %v1367 = vadd.f32 0.0, %v1366
    %v1368 = vpop.f32.mrb[0].mxu0
    %v1369 = vadd.f32 0.0, %v1368
    %1370 = vmatprep.mubr.bf16.mxu0 %v427
    %1371 = vmatmul.mubr.bf16.gmra.mrb[0].mxu0 %v426
    %v1372 = vpop.f32.mrb[0].mxu0
    %v1373 = vadd.f32 0.0, %v1372
    %v1374 = vpop.f32.mrb[0].mxu0
    %v1375 = vadd.f32 0.0, %v1374
    %v1376 = vpop.f32.mrb[0].mxu0
    %v1377 = vadd.f32 0.0, %v1376
    %v1378 = vpop.f32.mrb[0].mxu0
    %v1379 = vadd.f32 0.0, %v1378
    %1380 = vmatprep.mubr.bf16.mxu0 %v429
    %1381 = vmatmul.mubr.bf16.gmra.mrb[0].mxu0 %v428
    %v1382 = vpop.f32.mrb[0].mxu0
    %v1383 = vadd.f32 0.0, %v1382
    %v1384 = vpop.f32.mrb[0].mxu0
    %v1385 = vadd.f32 0.0, %v1384
    %v1386 = vpop.f32.mrb[0].mxu0
    %v1387 = vadd.f32 0.0, %v1386
    %v1388 = vpop.f32.mrb[0].mxu0
    %v1389 = vadd.f32 0.0, %v1388
    %1390 = vdwg.mxu0
    %1391 = vmatprep.subr.bf16.mxu0 %v945
    %1392 = vmatpush1.bf16.msra.mxu0 %v944
    %1393 = vmatprep.subr.bf16.mxu0 %v953
    %1394 = vmatpush1.bf16.msra.mxu0 %v952
    %1395 = vmatprep.subr.bf16.mxu0 %v961
    %1396 = vmatpush1.bf16.msra.mxu0 %v960
    %1397 = vmatprep.subr.bf16.mxu0 %v969
    %1398 = vmatpush1.bf16.msra.mxu0 %v968
    %1399 = vmatprep.subr.bf16.mxu0 %v977
    %1400 = vmatpush1.bf16.msra.mxu0 %v976
    %1401 = vmatprep.subr.bf16.mxu0 %v985
    %1402 = vmatpush1.bf16.msra.mxu0 %v984
    %1403 = vmatprep.subr.bf16.mxu0 %v993
    %1404 = vmatpush1.bf16.msra.mxu0 %v992
    %1405 = vmatprep.subr.bf16.mxu0 %v1001
    %1406 = vmatpush1.bf16.msra.mxu0 %v1000
    %1407 = vmatprep.subr.bf16.mxu0 %v1009
    %1408 = vmatpush1.bf16.msra.mxu0 %v1008
    %1409 = vmatprep.subr.bf16.mxu0 %v1017
    %1410 = vmatpush1.bf16.msra.mxu0 %v1016
    %1411 = vmatprep.subr.bf16.mxu0 %v1025
    %1412 = vmatpush1.bf16.msra.mxu0 %v1024
    %1413 = vmatprep.subr.bf16.mxu0 %v1033
    %1414 = vmatpush1.bf16.msra.mxu0 %v1032
    %1415 = vmatprep.subr.bf16.mxu0 %v1041
    %1416 = vmatpush1.bf16.msra.mxu0 %v1040
    %1417 = vmatprep.subr.bf16.mxu0 %v1049
    %1418 = vmatpush1.bf16.msra.mxu0 %v1048
    %1419 = vmatprep.subr.bf16.mxu0 %v1057
    %1420 = vmatpush1.bf16.msra.mxu0 %v1056
    %1421 = vmatprep.subr.bf16.mxu0 %v1065
    %1422 = vmatpush1.bf16.msra.mxu0 %v1064
    %1423 = vmatprep.mubr.bf16.mxu0 %v399
    %1424 = vmatmul.mubr.bf16.gmra.mrb[0].mxu0 %v398
    %v1425 = vpop.f32.mrb[0].mxu0
    %v1426 = vadd.f32 0.0, %v1425
    %v1427 = vpop.f32.mrb[0].mxu0
    %v1428 = vadd.f32 0.0, %v1427
    %v1429 = vpop.f32.mrb[0].mxu0
    %v1430 = vadd.f32 0.0, %v1429
    %v1431 = vpop.f32.mrb[0].mxu0
    %v1432 = vadd.f32 0.0, %v1431
    %1433 = vmatprep.mubr.bf16.mxu0 %v401
    %1434 = vmatmul.mubr.bf16.gmra.mrb[0].mxu0 %v400
    %v1435 = vpop.f32.mrb[0].mxu0
    %v1436 = vadd.f32 0.0, %v1435
    %v1437 = vpop.f32.mrb[0].mxu0
    %v1438 = vadd.f32 0.0, %v1437
    %v1439 = vpop.f32.mrb[0].mxu0
    %v1440 = vadd.f32 0.0, %v1439
    %v1441 = vpop.f32.mrb[0].mxu0
    %v1442 = vadd.f32 0.0, %v1441
    %1443 = vmatprep.mubr.bf16.mxu0 %v403
    %1444 = vmatmul.mubr.bf16.gmra.mrb[0].mxu0 %v402
    %v1445 = vpop.f32.mrb[0].mxu0
    %v1446 = vadd.f32 0.0, %v1445
    %v1447 = vpop.f32.mrb[0].mxu0
    %v1448 = vadd.f32 0.0, %v1447
    %v1449 = vpop.f32.mrb[0].mxu0
    %v1450 = vadd.f32 0.0, %v1449
    %v1451 = vpop.f32.mrb[0].mxu0
    %v1452 = vadd.f32 0.0, %v1451
    %1453 = vmatprep.mubr.bf16.mxu0 %v405
    %1454 = vmatmul.mubr.bf16.gmra.mrb[0].mxu0 %v404
    %v1455 = vpop.f32.mrb[0].mxu0
    %v1456 = vadd.f32 0.0, %v1455
    %v1457 = vpop.f32.mrb[0].mxu0
    %v1458 = vadd.f32 0.0, %v1457
    %v1459 = vpop.f32.mrb[0].mxu0
    %v1460 = vadd.f32 0.0, %v1459
    %v1461 = vpop.f32.mrb[0].mxu0
    %v1462 = vadd.f32 0.0, %v1461
    %1463 = vmatprep.mubr.bf16.mxu0 %v407
    %1464 = vmatmul.mubr.bf16.gmra.mrb[0].mxu0 %v406
    %v1465 = vpop.f32.mrb[0].mxu0
    %v1466 = vadd.f32 0.0, %v1465
    %v1467 = vpop.f32.mrb[0].mxu0
    %v1468 = vadd.f32 0.0, %v1467
    %v1469 = vpop.f32.mrb[0].mxu0
    %v1470 = vadd.f32 0.0, %v1469
    %v1471 = vpop.f32.mrb[0].mxu0
    %v1472 = vadd.f32 0.0, %v1471
    %1473 = vmatprep.mubr.bf16.mxu0 %v409
    %1474 = vmatmul.mubr.bf16.gmra.mrb[0].mxu0 %v408
    %v1475 = vpop.f32.mrb[0].mxu0
    %v1476 = vadd.f32 0.0, %v1475
    %v1477 = vpop.f32.mrb[0].mxu0
    %v1478 = vadd.f32 0.0, %v1477
    %v1479 = vpop.f32.mrb[0].mxu0
    %v1480 = vadd.f32 0.0, %v1479
    %v1481 = vpop.f32.mrb[0].mxu0
    %v1482 = vadd.f32 0.0, %v1481
    %1483 = vmatprep.mubr.bf16.mxu0 %v411
    %1484 = vmatmul.mubr.bf16.gmra.mrb[0].mxu0 %v410
    %v1485 = vpop.f32.mrb[0].mxu0
    %v1486 = vadd.f32 0.0, %v1485
    %v1487 = vpop.f32.mrb[0].mxu0
    %v1488 = vadd.f32 0.0, %v1487
    %v1489 = vpop.f32.mrb[0].mxu0
    %v1490 = vadd.f32 0.0, %v1489
    %v1491 = vpop.f32.mrb[0].mxu0
    %v1492 = vadd.f32 0.0, %v1491
    %1493 = vmatprep.mubr.bf16.mxu0 %v413
    %1494 = vmatmul.mubr.bf16.gmra.mrb[0].mxu0 %v412
    %v1495 = vpop.f32.mrb[0].mxu0
    %v1496 = vadd.f32 0.0, %v1495
    %v1497 = vpop.f32.mrb[0].mxu0
    %v1498 = vadd.f32 0.0, %v1497
    %v1499 = vpop.f32.mrb[0].mxu0
    %v1500 = vadd.f32 0.0, %v1499
    %v1501 = vpop.f32.mrb[0].mxu0
    %v1502 = vadd.f32 0.0, %v1501
    %1503 = vmatprep.mubr.bf16.mxu0 %v415
    %1504 = vmatmul.mubr.bf16.gmra.mrb[0].mxu0 %v414
    %v1505 = vpop.f32.mrb[0].mxu0
    %v1506 = vadd.f32 0.0, %v1505
    %v1507 = vpop.f32.mrb[0].mxu0
    %v1508 = vadd.f32 0.0, %v1507
    %v1509 = vpop.f32.mrb[0].mxu0
    %v1510 = vadd.f32 0.0, %v1509
    %v1511 = vpop.f32.mrb[0].mxu0
    %v1512 = vadd.f32 0.0, %v1511
    %1513 = vmatprep.mubr.bf16.mxu0 %v417
    %1514 = vmatmul.mubr.bf16.gmra.mrb[0].mxu0 %v416
    %v1515 = vpop.f32.mrb[0].mxu0
    %v1516 = vadd.f32 0.0, %v1515
    %v1517 = vpop.f32.mrb[0].mxu0
    %v1518 = vadd.f32 0.0, %v1517
    %v1519 = vpop.f32.mrb[0].mxu0
    %v1520 = vadd.f32 0.0, %v1519
    %v1521 = vpop.f32.mrb[0].mxu0
    %v1522 = vadd.f32 0.0, %v1521
    %1523 = vmatprep.mubr.bf16.mxu0 %v419
    %1524 = vmatmul.mubr.bf16.gmra.mrb[0].mxu0 %v418
    %v1525 = vpop.f32.mrb[0].mxu0
    %v1526 = vadd.f32 0.0, %v1525
    %v1527 = vpop.f32.mrb[0].mxu0
    %v1528 = vadd.f32 0.0, %v1527
    %v1529 = vpop.f32.mrb[0].mxu0
    %v1530 = vadd.f32 0.0, %v1529
    %v1531 = vpop.f32.mrb[0].mxu0
    %v1532 = vadd.f32 0.0, %v1531
    %1533 = vmatprep.mubr.bf16.mxu0 %v421
    %1534 = vmatmul.mubr.bf16.gmra.mrb[0].mxu0 %v420
    %v1535 = vpop.f32.mrb[0].mxu0
    %v1536 = vadd.f32 0.0, %v1535
    %v1537 = vpop.f32.mrb[0].mxu0
    %v1538 = vadd.f32 0.0, %v1537
    %v1539 = vpop.f32.mrb[0].mxu0
    %v1540 = vadd.f32 0.0, %v1539
    %v1541 = vpop.f32.mrb[0].mxu0
    %v1542 = vadd.f32 0.0, %v1541
    %1543 = vmatprep.mubr.bf16.mxu0 %v423
    %1544 = vmatmul.mubr.bf16.gmra.mrb[0].mxu0 %v422
    %v1545 = vpop.f32.mrb[0].mxu0
    %v1546 = vadd.f32 0.0, %v1545
    %v1547 = vpop.f32.mrb[0].mxu0
    %v1548 = vadd.f32 0.0, %v1547
    %v1549 = vpop.f32.mrb[0].mxu0
    %v1550 = vadd.f32 0.0, %v1549
    %v1551 = vpop.f32.mrb[0].mxu0
    %v1552 = vadd.f32 0.0, %v1551
    %1553 = vmatprep.mubr.bf16.mxu0 %v425
    %1554 = vmatmul.mubr.bf16.gmra.mrb[0].mxu0 %v424
    %v1555 = vpop.f32.mrb[0].mxu0
    %v1556 = vadd.f32 0.0, %v1555
    %v1557 = vpop.f32.mrb[0].mxu0
    %v1558 = vadd.f32 0.0, %v1557
    %v1559 = vpop.f32.mrb[0].mxu0
    %v1560 = vadd.f32 0.0, %v1559
    %v1561 = vpop.f32.mrb[0].mxu0
    %v1562 = vadd.f32 0.0, %v1561
    %1563 = vmatprep.mubr.bf16.mxu0 %v427
    %1564 = vmatmul.mubr.bf16.gmra.mrb[0].mxu0 %v426
    %v1565 = vpop.f32.mrb[0].mxu0
    %v1566 = vadd.f32 0.0, %v1565
    %v1567 = vpop.f32.mrb[0].mxu0
    %v1568 = vadd.f32 0.0, %v1567
    %v1569 = vpop.f32.mrb[0].mxu0
    %v1570 = vadd.f32 0.0, %v1569
    %v1571 = vpop.f32.mrb[0].mxu0
    %v1572 = vadd.f32 0.0, %v1571
    %1573 = vmatprep.mubr.bf16.mxu0 %v429
    %1574 = vmatmul.mubr.bf16.gmra.mrb[0].mxu0 %v428
    %v1575 = vpop.f32.mrb[0].mxu0
    %v1576 = vadd.f32 0.0, %v1575
    %v1577 = vpop.f32.mrb[0].mxu0
    %v1578 = vadd.f32 0.0, %v1577
    %v1579 = vpop.f32.mrb[0].mxu0
    %v1580 = vadd.f32 0.0, %v1579
    %v1581 = vpop.f32.mrb[0].mxu0
    %v1582 = vadd.f32 0.0, %v1581
    %1583 = vdwg.mxu0
    %1584 = vmatprep.subr.bf16.mxu0 %v947
    %1585 = vmatpush1.bf16.msra.mxu0 %v946
    %1586 = vmatprep.subr.bf16.mxu0 %v955
    %1587 = vmatpush1.bf16.msra.mxu0 %v954
    %1588 = vmatprep.subr.bf16.mxu0 %v963
    %1589 = vmatpush1.bf16.msra.mxu0 %v962
    %1590 = vmatprep.subr.bf16.mxu0 %v971
    %1591 = vmatpush1.bf16.msra.mxu0 %v970
    %1592 = vmatprep.subr.bf16.mxu0 %v979
    %1593 = vmatpush1.bf16.msra.mxu0 %v978
    %1594 = vmatprep.subr.bf16.mxu0 %v987
    %1595 = vmatpush1.bf16.msra.mxu0 %v986
    %1596 = vmatprep.subr.bf16.mxu0 %v995
    %1597 = vmatpush1.bf16.msra.mxu0 %v994
    %1598 = vmatprep.subr.bf16.mxu0 %v1003
    %1599 = vmatpush1.bf16.msra.mxu0 %v1002
    %1600 = vmatprep.subr.bf16.mxu0 %v1011
    %1601 = vmatpush1.bf16.msra.mxu0 %v1010
    %1602 = vmatprep.subr.bf16.mxu0 %v1019
    %1603 = vmatpush1.bf16.msra.mxu0 %v1018
    %1604 = vmatprep.subr.bf16.mxu0 %v1027
    %1605 = vmatpush1.bf16.msra.mxu0 %v1026
    %1606 = vmatprep.subr.bf16.mxu0 %v1035
    %1607 = vmatpush1.bf16.msra.mxu0 %v1034
    %1608 = vmatprep.subr.bf16.mxu0 %v1043
    %1609 = vmatpush1.bf16.msra.mxu0 %v1042
    %1610 = vmatprep.subr.bf16.mxu0 %v1051
    %1611 = vmatpush1.bf16.msra.mxu0 %v1050
    %1612 = vmatprep.subr.bf16.mxu0 %v1059
    %1613 = vmatpush1.bf16.msra.mxu0 %v1058
    %1614 = vmatprep.subr.bf16.mxu0 %v1067
    %1615 = vmatpush1.bf16.msra.mxu0 %v1066
    %1616 = vmatprep.mubr.bf16.mxu0 %v399
    %1617 = vmatmul.mubr.bf16.gmra.mrb[0].mxu0 %v398
    %v1618 = vpop.f32.mrb[0].mxu0
    %v1619 = vadd.f32 0.0, %v1618
    %v1620 = vpop.f32.mrb[0].mxu0
    %v1621 = vadd.f32 0.0, %v1620
    %v1622 = vpop.f32.mrb[0].mxu0
    %v1623 = vadd.f32 0.0, %v1622
    %v1624 = vpop.f32.mrb[0].mxu0
    %v1625 = vadd.f32 0.0, %v1624
    %1626 = vmatprep.mubr.bf16.mxu0 %v401
    %1627 = vmatmul.mubr.bf16.gmra.mrb[0].mxu0 %v400
    %v1628 = vpop.f32.mrb[0].mxu0
    %v1629 = vadd.f32 0.0, %v1628
    %v1630 = vpop.f32.mrb[0].mxu0
    %v1631 = vadd.f32 0.0, %v1630
    %v1632 = vpop.f32.mrb[0].mxu0
    %v1633 = vadd.f32 0.0, %v1632
    %v1634 = vpop.f32.mrb[0].mxu0
    %v1635 = vadd.f32 0.0, %v1634
    %1636 = vmatprep.mubr.bf16.mxu0 %v403
    %1637 = vmatmul.mubr.bf16.gmra.mrb[0].mxu0 %v402
    %v1638 = vpop.f32.mrb[0].mxu0
    %v1639 = vadd.f32 0.0, %v1638
    %v1640 = vpop.f32.mrb[0].mxu0
    %v1641 = vadd.f32 0.0, %v1640
    %v1642 = vpop.f32.mrb[0].mxu0
    %v1643 = vadd.f32 0.0, %v1642
    %v1644 = vpop.f32.mrb[0].mxu0
    %v1645 = vadd.f32 0.0, %v1644
    %1646 = vmatprep.mubr.bf16.mxu0 %v405
    %1647 = vmatmul.mubr.bf16.gmra.mrb[0].mxu0 %v404
    %v1648 = vpop.f32.mrb[0].mxu0
    %v1649 = vadd.f32 0.0, %v1648
    %v1650 = vpop.f32.mrb[0].mxu0
    %v1651 = vadd.f32 0.0, %v1650
    %v1652 = vpop.f32.mrb[0].mxu0
    %v1653 = vadd.f32 0.0, %v1652
    %v1654 = vpop.f32.mrb[0].mxu0
    %v1655 = vadd.f32 0.0, %v1654
    %1656 = vmatprep.mubr.bf16.mxu0 %v407
    %1657 = vmatmul.mubr.bf16.gmra.mrb[0].mxu0 %v406
    %v1658 = vpop.f32.mrb[0].mxu0
    %v1659 = vadd.f32 0.0, %v1658
    %v1660 = vpop.f32.mrb[0].mxu0
    %v1661 = vadd.f32 0.0, %v1660
    %v1662 = vpop.f32.mrb[0].mxu0
    %v1663 = vadd.f32 0.0, %v1662
    %v1664 = vpop.f32.mrb[0].mxu0
    %v1665 = vadd.f32 0.0, %v1664
    %1666 = vmatprep.mubr.bf16.mxu0 %v409
    %1667 = vmatmul.mubr.bf16.gmra.mrb[0].mxu0 %v408
    %v1668 = vpop.f32.mrb[0].mxu0
    %v1669 = vadd.f32 0.0, %v1668
    %v1670 = vpop.f32.mrb[0].mxu0
    %v1671 = vadd.f32 0.0, %v1670
    %v1672 = vpop.f32.mrb[0].mxu0
    %v1673 = vadd.f32 0.0, %v1672
    %v1674 = vpop.f32.mrb[0].mxu0
    %v1675 = vadd.f32 0.0, %v1674
    %1676 = vmatprep.mubr.bf16.mxu0 %v411
    %1677 = vmatmul.mubr.bf16.gmra.mrb[0].mxu0 %v410
    %v1678 = vpop.f32.mrb[0].mxu0
    %v1679 = vadd.f32 0.0, %v1678
    %v1680 = vpop.f32.mrb[0].mxu0
    %v1681 = vadd.f32 0.0, %v1680
    %v1682 = vpop.f32.mrb[0].mxu0
    %v1683 = vadd.f32 0.0, %v1682
    %v1684 = vpop.f32.mrb[0].mxu0
    %v1685 = vadd.f32 0.0, %v1684
    %1686 = vmatprep.mubr.bf16.mxu0 %v413
    %1687 = vmatmul.mubr.bf16.gmra.mrb[0].mxu0 %v412
    %v1688 = vpop.f32.mrb[0].mxu0
    %v1689 = vadd.f32 0.0, %v1688
    %v1690 = vpop.f32.mrb[0].mxu0
    %v1691 = vadd.f32 0.0, %v1690
    %v1692 = vpop.f32.mrb[0].mxu0
    %v1693 = vadd.f32 0.0, %v1692
    %v1694 = vpop.f32.mrb[0].mxu0
    %v1695 = vadd.f32 0.0, %v1694
    %1696 = vmatprep.mubr.bf16.mxu0 %v415
    %1697 = vmatmul.mubr.bf16.gmra.mrb[0].mxu0 %v414
    %v1698 = vpop.f32.mrb[0].mxu0
    %v1699 = vadd.f32 0.0, %v1698
    %v1700 = vpop.f32.mrb[0].mxu0
    %v1701 = vadd.f32 0.0, %v1700
    %v1702 = vpop.f32.mrb[0].mxu0
    %v1703 = vadd.f32 0.0, %v1702
    %v1704 = vpop.f32.mrb[0].mxu0
    %v1705 = vadd.f32 0.0, %v1704
    %1706 = vmatprep.mubr.bf16.mxu0 %v417
    %1707 = vmatmul.mubr.bf16.gmra.mrb[0].mxu0 %v416
    %v1708 = vpop.f32.mrb[0].mxu0
    %v1709 = vadd.f32 0.0, %v1708
    %v1710 = vpop.f32.mrb[0].mxu0
    %v1711 = vadd.f32 0.0, %v1710
    %v1712 = vpop.f32.mrb[0].mxu0
    %v1713 = vadd.f32 0.0, %v1712
    %v1714 = vpop.f32.mrb[0].mxu0
    %v1715 = vadd.f32 0.0, %v1714
    %1716 = vmatprep.mubr.bf16.mxu0 %v419
    %1717 = vmatmul.mubr.bf16.gmra.mrb[0].mxu0 %v418
    %v1718 = vpop.f32.mrb[0].mxu0
    %v1719 = vadd.f32 0.0, %v1718
    %v1720 = vpop.f32.mrb[0].mxu0
    %v1721 = vadd.f32 0.0, %v1720
    %v1722 = vpop.f32.mrb[0].mxu0
    %v1723 = vadd.f32 0.0, %v1722
    %v1724 = vpop.f32.mrb[0].mxu0
    %v1725 = vadd.f32 0.0, %v1724
    %1726 = vmatprep.mubr.bf16.mxu0 %v421
    %1727 = vmatmul.mubr.bf16.gmra.mrb[0].mxu0 %v420
    %v1728 = vpop.f32.mrb[0].mxu0
    %v1729 = vadd.f32 0.0, %v1728
    %v1730 = vpop.f32.mrb[0].mxu0
    %v1731 = vadd.f32 0.0, %v1730
    %v1732 = vpop.f32.mrb[0].mxu0
    %v1733 = vadd.f32 0.0, %v1732
    %v1734 = vpop.f32.mrb[0].mxu0
    %v1735 = vadd.f32 0.0, %v1734
    %1736 = vmatprep.mubr.bf16.mxu0 %v423
    %1737 = vmatmul.mubr.bf16.gmra.mrb[0].mxu0 %v422
    %v1738 = vpop.f32.mrb[0].mxu0
    %v1739 = vadd.f32 0.0, %v1738
    %v1740 = vpop.f32.mrb[0].mxu0
    %v1741 = vadd.f32 0.0, %v1740
    %v1742 = vpop.f32.mrb[0].mxu0
    %v1743 = vadd.f32 0.0, %v1742
    %v1744 = vpop.f32.mrb[0].mxu0
    %v1745 = vadd.f32 0.0, %v1744
    %1746 = vmatprep.mubr.bf16.mxu0 %v425
    %1747 = vmatmul.mubr.bf16.gmra.mrb[0].mxu0 %v424
    %v1748 = vpop.f32.mrb[0].mxu0
    %v1749 = vadd.f32 0.0, %v1748
    %v1750 = vpop.f32.mrb[0].mxu0
    %v1751 = vadd.f32 0.0, %v1750
    %v1752 = vpop.f32.mrb[0].mxu0
    %v1753 = vadd.f32 0.0, %v1752
    %v1754 = vpop.f32.mrb[0].mxu0
    %v1755 = vadd.f32 0.0, %v1754
    %1756 = vmatprep.mubr.bf16.mxu0 %v427
    %1757 = vmatmul.mubr.bf16.gmra.mrb[0].mxu0 %v426
    %v1758 = vpop.f32.mrb[0].mxu0
    %v1759 = vadd.f32 0.0, %v1758
    %v1760 = vpop.f32.mrb[0].mxu0
    %v1761 = vadd.f32 0.0, %v1760
    %v1762 = vpop.f32.mrb[0].mxu0
    %v1763 = vadd.f32 0.0, %v1762
    %v1764 = vpop.f32.mrb[0].mxu0
    %v1765 = vadd.f32 0.0, %v1764
    %1766 = vmatprep.mubr.bf16.mxu0 %v429
    %1767 = vmatmul.mubr.bf16.gmra.mrb[0].mxu0 %v428
    %v1768 = vpop.f32.mrb[0].mxu0
    %v1769 = vadd.f32 0.0, %v1768
    %v1770 = vpop.f32.mrb[0].mxu0
    %v1771 = vadd.f32 0.0, %v1770
    %v1772 = vpop.f32.mrb[0].mxu0
    %v1773 = vadd.f32 0.0, %v1772
    %v1774 = vpop.f32.mrb[0].mxu0
    %v1775 = vadd.f32 0.0, %v1774
    %1776 = vdwg.mxu0
    %1777 = vmatprep.subr.bf16.mxu0 %v949
    %1778 = vmatpush1.bf16.msra.mxu0 %v948
    %1779 = vmatprep.subr.bf16.mxu0 %v957
    %1780 = vmatpush1.bf16.msra.mxu0 %v956
    %1781 = vmatprep.subr.bf16.mxu0 %v965
    %1782 = vmatpush1.bf16.msra.mxu0 %v964
    %1783 = vmatprep.subr.bf16.mxu0 %v973
    %1784 = vmatpush1.bf16.msra.mxu0 %v972
    %1785 = vmatprep.subr.bf16.mxu0 %v981
    %1786 = vmatpush1.bf16.msra.mxu0 %v980
    %1787 = vmatprep.subr.bf16.mxu0 %v989
    %1788 = vmatpush1.bf16.msra.mxu0 %v988
    %1789 = vmatprep.subr.bf16.mxu0 %v997
    %1790 = vmatpush1.bf16.msra.mxu0 %v996
    %1791 = vmatprep.subr.bf16.mxu0 %v1005
    %1792 = vmatpush1.bf16.msra.mxu0 %v1004
    %1793 = vmatprep.subr.bf16.mxu0 %v1013
    %1794 = vmatpush1.bf16.msra.mxu0 %v1012
    %1795 = vmatprep.subr.bf16.mxu0 %v1021
    %1796 = vmatpush1.bf16.msra.mxu0 %v1020
    %1797 = vmatprep.subr.bf16.mxu0 %v1029
    %1798 = vmatpush1.bf16.msra.mxu0 %v1028
    %1799 = vmatprep.subr.bf16.mxu0 %v1037
    %1800 = vmatpush1.bf16.msra.mxu0 %v1036
    %1801 = vmatprep.subr.bf16.mxu0 %v1045
    %1802 = vmatpush1.bf16.msra.mxu0 %v1044
    %1803 = vmatprep.subr.bf16.mxu0 %v1053
    %1804 = vmatpush1.bf16.msra.mxu0 %v1052
    %1805 = vmatprep.subr.bf16.mxu0 %v1061
    %1806 = vmatpush1.bf16.msra.mxu0 %v1060
    %1807 = vmatprep.subr.bf16.mxu0 %v1069
    %1808 = vmatpush1.bf16.msra.mxu0 %v1068
    %1809 = vmatprep.mubr.bf16.mxu0 %v399
    %1810 = vmatmul.mubr.bf16.gmra.mrb[0].mxu0 %v398
    %v1811 = vpop.f32.mrb[0].mxu0
    %v1812 = vadd.f32 0.0, %v1811
    %v1813 = vpop.f32.mrb[0].mxu0
    %v1814 = vadd.f32 0.0, %v1813
    %v1815 = vpop.f32.mrb[0].mxu0
    %v1816 = vadd.f32 0.0, %v1815
    %v1817 = vpop.f32.mrb[0].mxu0
    %v1818 = vadd.f32 0.0, %v1817
    %1819 = vmatprep.mubr.bf16.mxu0 %v401
    %1820 = vmatmul.mubr.bf16.gmra.mrb[0].mxu0 %v400
    %v1821 = vpop.f32.mrb[0].mxu0
    %v1822 = vadd.f32 0.0, %v1821
    %v1823 = vpop.f32.mrb[0].mxu0
    %v1824 = vadd.f32 0.0, %v1823
    %v1825 = vpop.f32.mrb[0].mxu0
    %v1826 = vadd.f32 0.0, %v1825
    %v1827 = vpop.f32.mrb[0].mxu0
    %v1828 = vadd.f32 0.0, %v1827
    %1829 = vmatprep.mubr.bf16.mxu0 %v403
    %1830 = vmatmul.mubr.bf16.gmra.mrb[0].mxu0 %v402
    %v1831 = vpop.f32.mrb[0].mxu0
    %v1832 = vadd.f32 0.0, %v1831
    %v1833 = vpop.f32.mrb[0].mxu0
    %v1834 = vadd.f32 0.0, %v1833
    %v1835 = vpop.f32.mrb[0].mxu0
    %v1836 = vadd.f32 0.0, %v1835
    %v1837 = vpop.f32.mrb[0].mxu0
    %v1838 = vadd.f32 0.0, %v1837
    %1839 = vmatprep.mubr.bf16.mxu0 %v405
    %1840 = vmatmul.mubr.bf16.gmra.mrb[0].mxu0 %v404
    %v1841 = vpop.f32.mrb[0].mxu0
    %v1842 = vadd.f32 0.0, %v1841
    %v1843 = vpop.f32.mrb[0].mxu0
    %v1844 = vadd.f32 0.0, %v1843
    %v1845 = vpop.f32.mrb[0].mxu0
    %v1846 = vadd.f32 0.0, %v1845
    %v1847 = vpop.f32.mrb[0].mxu0
    %v1848 = vadd.f32 0.0, %v1847
    %1849 = vmatprep.mubr.bf16.mxu0 %v407
    %1850 = vmatmul.mubr.bf16.gmra.mrb[0].mxu0 %v406
    %v1851 = vpop.f32.mrb[0].mxu0
    %v1852 = vadd.f32 0.0, %v1851
    %v1853 = vpop.f32.mrb[0].mxu0
    %v1854 = vadd.f32 0.0, %v1853
    %v1855 = vpop.f32.mrb[0].mxu0
    %v1856 = vadd.f32 0.0, %v1855
    %v1857 = vpop.f32.mrb[0].mxu0
    %v1858 = vadd.f32 0.0, %v1857
    %1859 = vmatprep.mubr.bf16.mxu0 %v409
    %1860 = vmatmul.mubr.bf16.gmra.mrb[0].mxu0 %v408
    %v1861 = vpop.f32.mrb[0].mxu0
    %v1862 = vadd.f32 0.0, %v1861
    %v1863 = vpop.f32.mrb[0].mxu0
    %v1864 = vadd.f32 0.0, %v1863
    %v1865 = vpop.f32.mrb[0].mxu0
    %v1866 = vadd.f32 0.0, %v1865
    %v1867 = vpop.f32.mrb[0].mxu0
    %v1868 = vadd.f32 0.0, %v1867
    %1869 = vmatprep.mubr.bf16.mxu0 %v411
    %1870 = vmatmul.mubr.bf16.gmra.mrb[0].mxu0 %v410
    %v1871 = vpop.f32.mrb[0].mxu0
    %v1872 = vadd.f32 0.0, %v1871
    %v1873 = vpop.f32.mrb[0].mxu0
    %v1874 = vadd.f32 0.0, %v1873
    %v1875 = vpop.f32.mrb[0].mxu0
    %v1876 = vadd.f32 0.0, %v1875
    %v1877 = vpop.f32.mrb[0].mxu0
    %v1878 = vadd.f32 0.0, %v1877
    %1879 = vmatprep.mubr.bf16.mxu0 %v413
    %1880 = vmatmul.mubr.bf16.gmra.mrb[0].mxu0 %v412
    %v1881 = vpop.f32.mrb[0].mxu0
    %v1882 = vadd.f32 0.0, %v1881
    %v1883 = vpop.f32.mrb[0].mxu0
    %v1884 = vadd.f32 0.0, %v1883
    %v1885 = vpop.f32.mrb[0].mxu0
    %v1886 = vadd.f32 0.0, %v1885
    %v1887 = vpop.f32.mrb[0].mxu0
    %v1888 = vadd.f32 0.0, %v1887
    %1889 = vmatprep.mubr.bf16.mxu0 %v415
    %1890 = vmatmul.mubr.bf16.gmra.mrb[0].mxu0 %v414
    %v1891 = vpop.f32.mrb[0].mxu0
    %v1892 = vadd.f32 0.0, %v1891
    %v1893 = vpop.f32.mrb[0].mxu0
    %v1894 = vadd.f32 0.0, %v1893
    %v1895 = vpop.f32.mrb[0].mxu0
    %v1896 = vadd.f32 0.0, %v1895
    %v1897 = vpop.f32.mrb[0].mxu0
    %v1898 = vadd.f32 0.0, %v1897
    %1899 = vmatprep.mubr.bf16.mxu0 %v417
    %1900 = vmatmul.mubr.bf16.gmra.mrb[0].mxu0 %v416
    %v1901 = vpop.f32.mrb[0].mxu0
    %v1902 = vadd.f32 0.0, %v1901
    %v1903 = vpop.f32.mrb[0].mxu0
    %v1904 = vadd.f32 0.0, %v1903
    %v1905 = vpop.f32.mrb[0].mxu0
    %v1906 = vadd.f32 0.0, %v1905
    %v1907 = vpop.f32.mrb[0].mxu0
    %v1908 = vadd.f32 0.0, %v1907
    %1909 = vmatprep.mubr.bf16.mxu0 %v419
    %1910 = vmatmul.mubr.bf16.gmra.mrb[0].mxu0 %v418
    %v1911 = vpop.f32.mrb[0].mxu0
    %v1912 = vadd.f32 0.0, %v1911
    %v1913 = vpop.f32.mrb[0].mxu0
    %v1914 = vadd.f32 0.0, %v1913
    %v1915 = vpop.f32.mrb[0].mxu0
    %v1916 = vadd.f32 0.0, %v1915
    %v1917 = vpop.f32.mrb[0].mxu0
    %v1918 = vadd.f32 0.0, %v1917
    %1919 = vmatprep.mubr.bf16.mxu0 %v421
    %1920 = vmatmul.mubr.bf16.gmra.mrb[0].mxu0 %v420
    %v1921 = vpop.f32.mrb[0].mxu0
    %v1922 = vadd.f32 0.0, %v1921
    %v1923 = vpop.f32.mrb[0].mxu0
    %v1924 = vadd.f32 0.0, %v1923
    %v1925 = vpop.f32.mrb[0].mxu0
    %v1926 = vadd.f32 0.0, %v1925
    %v1927 = vpop.f32.mrb[0].mxu0
    %v1928 = vadd.f32 0.0, %v1927
    %1929 = vmatprep.mubr.bf16.mxu0 %v423
    %1930 = vmatmul.mubr.bf16.gmra.mrb[0].mxu0 %v422
    %v1931 = vpop.f32.mrb[0].mxu0
    %v1932 = vadd.f32 0.0, %v1931
    %v1933 = vpop.f32.mrb[0].mxu0
    %v1934 = vadd.f32 0.0, %v1933
    %v1935 = vpop.f32.mrb[0].mxu0
    %v1936 = vadd.f32 0.0, %v1935
    %v1937 = vpop.f32.mrb[0].mxu0
    %v1938 = vadd.f32 0.0, %v1937
    %1939 = vmatprep.mubr.bf16.mxu0 %v425
    %1940 = vmatmul.mubr.bf16.gmra.mrb[0].mxu0 %v424
    %v1941 = vpop.f32.mrb[0].mxu0
    %v1942 = vadd.f32 0.0, %v1941
    %v1943 = vpop.f32.mrb[0].mxu0
    %v1944 = vadd.f32 0.0, %v1943
    %v1945 = vpop.f32.mrb[0].mxu0
    %v1946 = vadd.f32 0.0, %v1945
    %v1947 = vpop.f32.mrb[0].mxu0
    %v1948 = vadd.f32 0.0, %v1947
    %1949 = vmatprep.mubr.bf16.mxu0 %v427
    %1950 = vmatmul.mubr.bf16.gmra.mrb[0].mxu0 %v426
    %v1951 = vpop.f32.mrb[0].mxu0
    %v1952 = vadd.f32 0.0, %v1951
    %v1953 = vpop.f32.mrb[0].mxu0
    %v1954 = vadd.f32 0.0, %v1953
    %v1955 = vpop.f32.mrb[0].mxu0
    %v1956 = vadd.f32 0.0, %v1955
    %v1957 = vpop.f32.mrb[0].mxu0
    %v1958 = vadd.f32 0.0, %v1957
    %1959 = vmatprep.mubr.bf16.mxu0 %v429
    %1960 = vmatmul.mubr.bf16.gmra.mrb[0].mxu0 %v428
    %v1961 = vpop.f32.mrb[0].mxu0
    %v1962 = vadd.f32 0.0, %v1961
    %v1963 = vpop.f32.mrb[0].mxu0
    %v1964 = vadd.f32 0.0, %v1963
    %v1965 = vpop.f32.mrb[0].mxu0
    %v1966 = vadd.f32 0.0, %v1965
    %v1967 = vpop.f32.mrb[0].mxu0
    %v1968 = vadd.f32 0.0, %v1967
    %1969 = vdwg.mxu0
    %1970 = vst [vmem:[%s3] sm:$0xff] %v1233
    %1971 = vst [vmem:[%s3 + $0x8] sm:$0xff] %v1235
    %1972 = vst [vmem:[%s3 + $0x10] sm:$0xff] %v1426
    %1973 = vst [vmem:[%s3 + $0x18] sm:$0xff] %v1428
    %1974 = vst [vmem:[%s3 + $0x20] sm:$0xff] %v1619
    %1975 = vst [vmem:[%s3 + $0x28] sm:$0xff] %v1621
    %1976 = vst [vmem:[%s3 + $0x30] sm:$0xff] %v1812
    %1977 = vst [vmem:[%s3 + $0x38] sm:$0xff] %v1814
    %1978 = vst [vmem:[%s3 + $0x40] sm:$0xff] %v1237
    %1979 = vst [vmem:[%s3 + $0x48] sm:$0xff] %v1239
    %1980 = vst [vmem:[%s3 + $0x50] sm:$0xff] %v1430
    %1981 = vst [vmem:[%s3 + $0x58] sm:$0xff] %v1432
    %1982 = vst [vmem:[%s3 + $0x60] sm:$0xff] %v1623
    %1983 = vst [vmem:[%s3 + $0x68] sm:$0xff] %v1625
    %1984 = vst [vmem:[%s3 + $0x70] sm:$0xff] %v1816
    %1985 = vst [vmem:[%s3 + $0x78] sm:$0xff] %v1818
    %1986 = vst [vmem:[%s3 + $0x80] sm:$0xff] %v1243
    %1987 = vst [vmem:[%s3 + $0x88] sm:$0xff] %v1245
    %1988 = vst [vmem:[%s3 + $0x90] sm:$0xff] %v1436
    %1989 = vst [vmem:[%s3 + $0x98] sm:$0xff] %v1438
    %1990 = vst [vmem:[%s3 + $0xa0] sm:$0xff] %v1629
    %1991 = vst [vmem:[%s3 + $0xa8] sm:$0xff] %v1631
    %1992 = vst [vmem:[%s3 + $0xb0] sm:$0xff] %v1822
    %1993 = vst [vmem:[%s3 + $0xb8] sm:$0xff] %v1824
    %1994 = vst [vmem:[%s3 + $0xc0] sm:$0xff] %v1247
    %1995 = vst [vmem:[%s3 + $0xc8] sm:$0xff] %v1249
    %1996 = vst [vmem:[%s3 + $0xd0] sm:$0xff] %v1440
    %1997 = vst [vmem:[%s3 + $0xd8] sm:$0xff] %v1442
    %1998 = vst [vmem:[%s3 + $0xe0] sm:$0xff] %v1633
    %1999 = vst [vmem:[%s3 + $0xe8] sm:$0xff] %v1635
    %2000 = vst [vmem:[%s3 + $0xf0] sm:$0xff] %v1826
    %2001 = vst [vmem:[%s3 + $0xf8] sm:$0xff] %v1828
    %2002 = vst [vmem:[%s3 + $0x100] sm:$0xff] %v1253
    %2003 = vst [vmem:[%s3 + $0x108] sm:$0xff] %v1255
    %2004 = vst [vmem:[%s3 + $0x110] sm:$0xff] %v1446
    %2005 = vst [vmem:[%s3 + $0x118] sm:$0xff] %v1448
    %2006 = vst [vmem:[%s3 + $0x120] sm:$0xff] %v1639
    %2007 = vst [vmem:[%s3 + $0x128] sm:$0xff] %v1641
    %2008 = vst [vmem:[%s3 + $0x130] sm:$0xff] %v1832
    %2009 = vst [vmem:[%s3 + $0x138] sm:$0xff] %v1834
    %2010 = vst [vmem:[%s3 + $0x140] sm:$0xff] %v1257
    %2011 = vst [vmem:[%s3 + $0x148] sm:$0xff] %v1259
    %2012 = vst [vmem:[%s3 + $0x150] sm:$0xff] %v1450
    %2013 = vst [vmem:[%s3 + $0x158] sm:$0xff] %v1452
    %2014 = vst [vmem:[%s3 + $0x160] sm:$0xff] %v1643
    %2015 = vst [vmem:[%s3 + $0x168] sm:$0xff] %v1645
    %2016 = vst [vmem:[%s3 + $0x170] sm:$0xff] %v1836
    %2017 = vst [vmem:[%s3 + $0x178] sm:$0xff] %v1838
    %2018 = vst [vmem:[%s3 + $0x180] sm:$0xff] %v1263
    %2019 = vst [vmem:[%s3 + $0x188] sm:$0xff] %v1265
    %2020 = vst [vmem:[%s3 + $0x190] sm:$0xff] %v1456
    %2021 = vst [vmem:[%s3 + $0x198] sm:$0xff] %v1458
    %2022 = vst [vmem:[%s3 + $0x1a0] sm:$0xff] %v1649
    %2023 = vst [vmem:[%s3 + $0x1a8] sm:$0xff] %v1651
    %2024 = vst [vmem:[%s3 + $0x1b0] sm:$0xff] %v1842
    %2025 = vst [vmem:[%s3 + $0x1b8] sm:$0xff] %v1844
    %2026 = vst [vmem:[%s3 + $0x1c0] sm:$0xff] %v1267
    %2027 = vst [vmem:[%s3 + $0x1c8] sm:$0xff] %v1269
    %2028 = vst [vmem:[%s3 + $0x1d0] sm:$0xff] %v1460
    %2029 = vst [vmem:[%s3 + $0x1d8] sm:$0xff] %v1462
    %2030 = vst [vmem:[%s3 + $0x1e0] sm:$0xff] %v1653
    %2031 = vst [vmem:[%s3 + $0x1e8] sm:$0xff] %v1655
    %2032 = vst [vmem:[%s3 + $0x1f0] sm:$0xff] %v1846
    %2033 = vst [vmem:[%s3 + $0x1f8] sm:$0xff] %v1848
    %2034 = vst [vmem:[%s3 + $0x200] sm:$0xff] %v1273
    %2035 = vst [vmem:[%s3 + $0x208] sm:$0xff] %v1275
    %2036 = vst [vmem:[%s3 + $0x210] sm:$0xff] %v1466
    %2037 = vst [vmem:[%s3 + $0x218] sm:$0xff] %v1468
    %2038 = vst [vmem:[%s3 + $0x220] sm:$0xff] %v1659
    %2039 = vst [vmem:[%s3 + $0x228] sm:$0xff] %v1661
    %2040 = vst [vmem:[%s3 + $0x230] sm:$0xff] %v1852
    %2041 = vst [vmem:[%s3 + $0x238] sm:$0xff] %v1854
    %2042 = vst [vmem:[%s3 + $0x240] sm:$0xff] %v1277
    %2043 = vst [vmem:[%s3 + $0x248] sm:$0xff] %v1279
    %2044 = vst [vmem:[%s3 + $0x250] sm:$0xff] %v1470
    %2045 = vst [vmem:[%s3 + $0x258] sm:$0xff] %v1472
    %2046 = vst [vmem:[%s3 + $0x260] sm:$0xff] %v1663
    %2047 = vst [vmem:[%s3 + $0x268] sm:$0xff] %v1665
    %2048 = vst [vmem:[%s3 + $0x270] sm:$0xff] %v1856
    %2049 = vst [vmem:[%s3 + $0x278] sm:$0xff] %v1858
    %2050 = vst [vmem:[%s3 + $0x280] sm:$0xff] %v1283
    %2051 = vst [vmem:[%s3 + $0x288] sm:$0xff] %v1285
    %2052 = vst [vmem:[%s3 + $0x290] sm:$0xff] %v1476
    %2053 = vst [vmem:[%s3 + $0x298] sm:$0xff] %v1478
    %2054 = vst [vmem:[%s3 + $0x2a0] sm:$0xff] %v1669
    %2055 = vst [vmem:[%s3 + $0x2a8] sm:$0xff] %v1671
    %2056 = vst [vmem:[%s3 + $0x2b0] sm:$0xff] %v1862
    %2057 = vst [vmem:[%s3 + $0x2b8] sm:$0xff] %v1864
    %2058 = vst [vmem:[%s3 + $0x2c0] sm:$0xff] %v1287
    %2059 = vst [vmem:[%s3 + $0x2c8] sm:$0xff] %v1289
    %2060 = vst [vmem:[%s3 + $0x2d0] sm:$0xff] %v1480
    %2061 = vst [vmem:[%s3 + $0x2d8] sm:$0xff] %v1482
    %2062 = vst [vmem:[%s3 + $0x2e0] sm:$0xff] %v1673
    %2063 = vst [vmem:[%s3 + $0x2e8] sm:$0xff] %v1675
    %2064 = vst [vmem:[%s3 + $0x2f0] sm:$0xff] %v1866
    %2065 = vst [vmem:[%s3 + $0x2f8] sm:$0xff] %v1868
    %2066 = vst [vmem:[%s3 + $0x300] sm:$0xff] %v1293
    %2067 = vst [vmem:[%s3 + $0x308] sm:$0xff] %v1295
    %2068 = vst [vmem:[%s3 + $0x310] sm:$0xff] %v1486
    %2069 = vst [vmem:[%s3 + $0x318] sm:$0xff] %v1488
    %2070 = vst [vmem:[%s3 + $0x320] sm:$0xff] %v1679
    %2071 = vst [vmem:[%s3 + $0x328] sm:$0xff] %v1681
    %2072 = vst [vmem:[%s3 + $0x330] sm:$0xff] %v1872
    %2073 = vst [vmem:[%s3 + $0x338] sm:$0xff] %v1874
    %2074 = vst [vmem:[%s3 + $0x340] sm:$0xff] %v1297
    %2075 = vst [vmem:[%s3 + $0x348] sm:$0xff] %v1299
    %2076 = vst [vmem:[%s3 + $0x350] sm:$0xff] %v1490
    %2077 = vst [vmem:[%s3 + $0x358] sm:$0xff] %v1492
    %2078 = vst [vmem:[%s3 + $0x360] sm:$0xff] %v1683
    %2079 = vst [vmem:[%s3 + $0x368] sm:$0xff] %v1685
    %2080 = vst [vmem:[%s3 + $0x370] sm:$0xff] %v1876
    %2081 = vst [vmem:[%s3 + $0x378] sm:$0xff] %v1878
    %2082 = vst [vmem:[%s3 + $0x380] sm:$0xff] %v1303
    %2083 = vst [vmem:[%s3 + $0x388] sm:$0xff] %v1305
    %2084 = vst [vmem:[%s3 + $0x390] sm:$0xff] %v1496
    %2085 = vst [vmem:[%s3 + $0x398] sm:$0xff] %v1498
    %2086 = vst [vmem:[%s3 + $0x3a0] sm:$0xff] %v1689
    %2087 = vst [vmem:[%s3 + $0x3a8] sm:$0xff] %v1691
    %2088 = vst [vmem:[%s3 + $0x3b0] sm:$0xff] %v1882
    %2089 = vst [vmem:[%s3 + $0x3b8] sm:$0xff] %v1884
    %2090 = vst [vmem:[%s3 + $0x3c0] sm:$0xff] %v1307
    %2091 = vst [vmem:[%s3 + $0x3c8] sm:$0xff] %v1309
    %2092 = vst [vmem:[%s3 + $0x3d0] sm:$0xff] %v1500
    %2093 = vst [vmem:[%s3 + $0x3d8] sm:$0xff] %v1502
    %2094 = vst [vmem:[%s3 + $0x3e0] sm:$0xff] %v1693
    %2095 = vst [vmem:[%s3 + $0x3e8] sm:$0xff] %v1695
    %2096 = vst [vmem:[%s3 + $0x3f0] sm:$0xff] %v1886
    %2097 = vst [vmem:[%s3 + $0x3f8] sm:$0xff] %v1888
    %2098 = vst [vmem:[%s3 + $0x400] sm:$0xff] %v1313
    %2099 = vst [vmem:[%s3 + $0x408] sm:$0xff] %v1315
    %2100 = vst [vmem:[%s3 + $0x410] sm:$0xff] %v1506
    %2101 = vst [vmem:[%s3 + $0x418] sm:$0xff] %v1508
    %2102 = vst [vmem:[%s3 + $0x420] sm:$0xff] %v1699
    %2103 = vst [vmem:[%s3 + $0x428] sm:$0xff] %v1701
    %2104 = vst [vmem:[%s3 + $0x430] sm:$0xff] %v1892
    %2105 = vst [vmem:[%s3 + $0x438] sm:$0xff] %v1894
    %2106 = vst [vmem:[%s3 + $0x440] sm:$0xff] %v1317
    %2107 = vst [vmem:[%s3 + $0x448] sm:$0xff] %v1319
    %2108 = vst [vmem:[%s3 + $0x450] sm:$0xff] %v1510
    %2109 = vst [vmem:[%s3 + $0x458] sm:$0xff] %v1512
    %2110 = vst [vmem:[%s3 + $0x460] sm:$0xff] %v1703
    %2111 = vst [vmem:[%s3 + $0x468] sm:$0xff] %v1705
    %2112 = vst [vmem:[%s3 + $0x470] sm:$0xff] %v1896
    %2113 = vst [vmem:[%s3 + $0x478] sm:$0xff] %v1898
    %2114 = vst [vmem:[%s3 + $0x480] sm:$0xff] %v1323
    %2115 = vst [vmem:[%s3 + $0x488] sm:$0xff] %v1325
    %2116 = vst [vmem:[%s3 + $0x490] sm:$0xff] %v1516
    %2117 = vst [vmem:[%s3 + $0x498] sm:$0xff] %v1518
    %2118 = vst [vmem:[%s3 + $0x4a0] sm:$0xff] %v1709
    %2119 = vst [vmem:[%s3 + $0x4a8] sm:$0xff] %v1711
    %2120 = vst [vmem:[%s3 + $0x4b0] sm:$0xff] %v1902
    %2121 = vst [vmem:[%s3 + $0x4b8] sm:$0xff] %v1904
    %2122 = vst [vmem:[%s3 + $0x4c0] sm:$0xff] %v1327
    %2123 = vst [vmem:[%s3 + $0x4c8] sm:$0xff] %v1329
    %2124 = vst [vmem:[%s3 + $0x4d0] sm:$0xff] %v1520
    %2125 = vst [vmem:[%s3 + $0x4d8] sm:$0xff] %v1522
    %2126 = vst [vmem:[%s3 + $0x4e0] sm:$0xff] %v1713
    %2127 = vst [vmem:[%s3 + $0x4e8] sm:$0xff] %v1715
    %2128 = vst [vmem:[%s3 + $0x4f0] sm:$0xff] %v1906
    %2129 = vst [vmem:[%s3 + $0x4f8] sm:$0xff] %v1908
    %2130 = vst [vmem:[%s3 + $0x500] sm:$0xff] %v1333
    %2131 = vst [vmem:[%s3 + $0x508] sm:$0xff] %v1335
    %2132 = vst [vmem:[%s3 + $0x510] sm:$0xff] %v1526
    %2133 = vst [vmem:[%s3 + $0x518] sm:$0xff] %v1528
    %2134 = vst [vmem:[%s3 + $0x520] sm:$0xff] %v1719
    %2135 = vst [vmem:[%s3 + $0x528] sm:$0xff] %v1721
    %2136 = vst [vmem:[%s3 + $0x530] sm:$0xff] %v1912
    %2137 = vst [vmem:[%s3 + $0x538] sm:$0xff] %v1914
    %2138 = vst [vmem:[%s3 + $0x540] sm:$0xff] %v1337
    %2139 = vst [vmem:[%s3 + $0x548] sm:$0xff] %v1339
    %2140 = vst [vmem:[%s3 + $0x550] sm:$0xff] %v1530
    %2141 = vst [vmem:[%s3 + $0x558] sm:$0xff] %v1532
    %2142 = vst [vmem:[%s3 + $0x560] sm:$0xff] %v1723
    %2143 = vst [vmem:[%s3 + $0x568] sm:$0xff] %v1725
    %2144 = vst [vmem:[%s3 + $0x570] sm:$0xff] %v1916
    %2145 = vst [vmem:[%s3 + $0x578] sm:$0xff] %v1918
    %2146 = vst [vmem:[%s3 + $0x580] sm:$0xff] %v1343
    %2147 = vst [vmem:[%s3 + $0x588] sm:$0xff] %v1345
    %2148 = vst [vmem:[%s3 + $0x590] sm:$0xff] %v1536
    %2149 = vst [vmem:[%s3 + $0x598] sm:$0xff] %v1538
    %2150 = vst [vmem:[%s3 + $0x5a0] sm:$0xff] %v1729
    %2151 = vst [vmem:[%s3 + $0x5a8] sm:$0xff] %v1731
    %2152 = vst [vmem:[%s3 + $0x5b0] sm:$0xff] %v1922
    %2153 = vst [vmem:[%s3 + $0x5b8] sm:$0xff] %v1924
    %2154 = vst [vmem:[%s3 + $0x5c0] sm:$0xff] %v1347
    %2155 = vst [vmem:[%s3 + $0x5c8] sm:$0xff] %v1349
    %2156 = vst [vmem:[%s3 + $0x5d0] sm:$0xff] %v1540
    %2157 = vst [vmem:[%s3 + $0x5d8] sm:$0xff] %v1542
    %2158 = vst [vmem:[%s3 + $0x5e0] sm:$0xff] %v1733
    %2159 = vst [vmem:[%s3 + $0x5e8] sm:$0xff] %v1735
    %2160 = vst [vmem:[%s3 + $0x5f0] sm:$0xff] %v1926
    %2161 = vst [vmem:[%s3 + $0x5f8] sm:$0xff] %v1928
    %2162 = vst [vmem:[%s3 + $0x600] sm:$0xff] %v1353
    %2163 = vst [vmem:[%s3 + $0x608] sm:$0xff] %v1355
    %2164 = vst [vmem:[%s3 + $0x610] sm:$0xff] %v1546
    %2165 = vst [vmem:[%s3 + $0x618] sm:$0xff] %v1548
    %2166 = vst [vmem:[%s3 + $0x620] sm:$0xff] %v1739
    %2167 = vst [vmem:[%s3 + $0x628] sm:$0xff] %v1741
    %2168 = vst [vmem:[%s3 + $0x630] sm:$0xff] %v1932
    %2169 = vst [vmem:[%s3 + $0x638] sm:$0xff] %v1934
    %2170 = vst [vmem:[%s3 + $0x640] sm:$0xff] %v1357
    %2171 = vst [vmem:[%s3 + $0x648] sm:$0xff] %v1359
    %2172 = vst [vmem:[%s3 + $0x650] sm:$0xff] %v1550
    %2173 = vst [vmem:[%s3 + $0x658] sm:$0xff] %v1552
    %2174 = vst [vmem:[%s3 + $0x660] sm:$0xff] %v1743
    %2175 = vst [vmem:[%s3 + $0x668] sm:$0xff] %v1745
    %2176 = vst [vmem:[%s3 + $0x670] sm:$0xff] %v1936
    %2177 = vst [vmem:[%s3 + $0x678] sm:$0xff] %v1938
    %2178 = vst [vmem:[%s3 + $0x680] sm:$0xff] %v1363
    %2179 = vst [vmem:[%s3 + $0x688] sm:$0xff] %v1365
    %2180 = vst [vmem:[%s3 + $0x690] sm:$0xff] %v1556
    %2181 = vst [vmem:[%s3 + $0x698] sm:$0xff] %v1558
    %2182 = vst [vmem:[%s3 + $0x6a0] sm:$0xff] %v1749
    %2183 = vst [vmem:[%s3 + $0x6a8] sm:$0xff] %v1751
    %2184 = vst [vmem:[%s3 + $0x6b0] sm:$0xff] %v1942
    %2185 = vst [vmem:[%s3 + $0x6b8] sm:$0xff] %v1944
    %2186 = vst [vmem:[%s3 + $0x6c0] sm:$0xff] %v1367
    %2187 = vst [vmem:[%s3 + $0x6c8] sm:$0xff] %v1369
    %2188 = vst [vmem:[%s3 + $0x6d0] sm:$0xff] %v1560
    %2189 = vst [vmem:[%s3 + $0x6d8] sm:$0xff] %v1562
    %2190 = vst [vmem:[%s3 + $0x6e0] sm:$0xff] %v1753
    %2191 = vst [vmem:[%s3 + $0x6e8] sm:$0xff] %v1755
    %2192 = vst [vmem:[%s3 + $0x6f0] sm:$0xff] %v1946
    %2193 = vst [vmem:[%s3 + $0x6f8] sm:$0xff] %v1948
    %2194 = vst [vmem:[%s3 + $0x700] sm:$0xff] %v1373
    %2195 = vst [vmem:[%s3 + $0x708] sm:$0xff] %v1375
    %2196 = vst [vmem:[%s3 + $0x710] sm:$0xff] %v1566
    %2197 = vst [vmem:[%s3 + $0x718] sm:$0xff] %v1568
    %2198 = vst [vmem:[%s3 + $0x720] sm:$0xff] %v1759
    %2199 = vst [vmem:[%s3 + $0x728] sm:$0xff] %v1761
    %2200 = vst [vmem:[%s3 + $0x730] sm:$0xff] %v1952
    %2201 = vst [vmem:[%s3 + $0x738] sm:$0xff] %v1954
    %2202 = vst [vmem:[%s3 + $0x740] sm:$0xff] %v1377
    %2203 = vst [vmem:[%s3 + $0x748] sm:$0xff] %v1379
    %2204 = vst [vmem:[%s3 + $0x750] sm:$0xff] %v1570
    %2205 = vst [vmem:[%s3 + $0x758] sm:$0xff] %v1572
    %2206 = vst [vmem:[%s3 + $0x760] sm:$0xff] %v1763
    %2207 = vst [vmem:[%s3 + $0x768] sm:$0xff] %v1765
    %2208 = vst [vmem:[%s3 + $0x770] sm:$0xff] %v1956
    %2209 = vst [vmem:[%s3 + $0x778] sm:$0xff] %v1958
    %2210 = vst [vmem:[%s3 + $0x780] sm:$0xff] %v1383
    %2211 = vst [vmem:[%s3 + $0x788] sm:$0xff] %v1385
    %2212 = vst [vmem:[%s3 + $0x790] sm:$0xff] %v1576
    %2213 = vst [vmem:[%s3 + $0x798] sm:$0xff] %v1578
    %2214 = vst [vmem:[%s3 + $0x7a0] sm:$0xff] %v1769
    %2215 = vst [vmem:[%s3 + $0x7a8] sm:$0xff] %v1771
    %2216 = vst [vmem:[%s3 + $0x7b0] sm:$0xff] %v1962
    %2217 = vst [vmem:[%s3 + $0x7b8] sm:$0xff] %v1964
    %2218 = vst [vmem:[%s3 + $0x7c0] sm:$0xff] %v1387
    %2219 = vst [vmem:[%s3 + $0x7c8] sm:$0xff] %v1389
    %2220 = vst [vmem:[%s3 + $0x7d0] sm:$0xff] %v1580
    %2221 = vst [vmem:[%s3 + $0x7d8] sm:$0xff] %v1582
    %2222 = vst [vmem:[%s3 + $0x7e0] sm:$0xff] %v1773
    %2223 = vst [vmem:[%s3 + $0x7e8] sm:$0xff] %v1775
    %2224 = vst [vmem:[%s3 + $0x7f0] sm:$0xff] %v1966
    %2225 = vst [vmem:[%s3 + $0x7f8] sm:$0xff] %v1968
    // Predicated region
    $region18: #{_lambda_.1} parent=1 // pred_check
      _
    $region19: #{_lambda_.1} parent=1 // pred_check_branch
      %2227 = sbr.rel (0) target = $region21
    $region20: #{_lambda_.1} parent=1 // pred_region
      _
    $region21: #{_lambda_.1} parent=1 // pred_fallthru
      _
    // Predicated region
    $region22: #{_lambda_.1} parent=1 // pred_check
      _
    $region23: #{_lambda_.1} parent=1 // pred_check_branch
      %2229 = sbr.rel (0) target = $region25
    $region24: #{_lambda_.1} parent=1 // pred_region
      _
    $region25: #{_lambda_.1} parent=1 // pred_fallthru
      _
    %2230 = vsyncpa [#allocation3], 1

</llo_original>
